<compile_context>
chip_gen: v7x
topology: tpu7x:2x2x1
jax: 0.10.0
libtpu: 0.0.40
codegen_flags: <defaults>
</compile_context>

<pallas_src>
import jax
import jax.numpy as jnp
from jax.experimental import pallas as pl
from jax.experimental.pallas import tpu as pltpu

NEG_SLOPE = 0.01  # torch.nn.LeakyReLU default


def _leaky(x):
    return jnp.where(x >= 0, x, NEG_SLOPE * x)


def _sigmoid(x):
    # Stable: exponentiate only non-positive values.
    e = jnp.exp(-jnp.abs(x))
    inv = 1.0 / (1.0 + e)
    return jnp.where(x >= 0, inv, e * inv)


def _make_kernel(cfg):
    K = cfg["mask_size"]
    lens = cfg["lengths"]   # per-block input lengths + final num_features

    def kernel(x_ref,
               w1_ref, b1_ref, s1_ref,
               w2_ref, b2_ref, s2_ref,
               w3_ref, b3_ref, s3_ref,
               w4_ref, b4_ref, s4_ref,
               fw1_ref, fb1_ref, fw2_ref, fb2_ref, fw3_ref, fb3_ref,
               out_ref):
        w_refs = [w1_ref, w2_ref, w3_ref, w4_ref]
        b_refs = [b1_ref, b2_ref, b3_ref, b4_ref]
        s_refs = [s1_ref, s2_ref, s3_ref, s4_ref]

        # (cin*Bb, L0) with cin == 1: rows are the batch rows of this grid block.
        acts = x_ref[...]

        for blk in range(4):
            lin = lens[blk]
            lc = lin - K + 1          # Conv1d output length
            lm = lc - K + 1           # stride-1 sliding-max length
            w_ref, b_ref, s_ref = w_refs[blk], b_refs[blk], s_refs[blk]

            # --- Conv1d on the MXU: one small matmul per tap k, shared by all
            # output channels.  w_ref[k] is (cout*Bb, cin*Bb) block-diagonal
            # over batch; acts[:, k:k+lc] is the k-shifted input (hoisted:
            # computed exactly once per block). ---
            conv = jnp.dot(w_ref[0], acts[:, 0:lc],
                           preferred_element_type=jnp.float32)
            for k in range(1, K):
                conv = conv + jnp.dot(w_ref[k], acts[:, k:k + lc],
                                      preferred_element_type=jnp.float32)
            conv = conv + b_ref[...]            # (cout*Bb, 1) lane-broadcast bias

            # --- MaxPool1d(kernel=K, stride=S): stride-1 sliding max across all
            # channels at once, then one strided-downsample selection matmul. ---
            m = conv[:, 0:lm]
            for k in range(1, K):
                m = jnp.maximum(m, conv[:, k:k + lm])
            pooled = jnp.dot(m, s_ref[...], preferred_element_type=jnp.float32)

            # --- LeakyReLU ---
            acts = _leaky(pooled)               # (cout*Bb, L_{blk+1})

        # Block 4 has cout == 1, so `acts` is exactly x[:, 0, :] = (Bb, num_features).
        h = acts
        h = _leaky(jnp.dot(h, fw1_ref[...],
                           preferred_element_type=jnp.float32) + fb1_ref[...])
        h = _leaky(jnp.dot(h, fw2_ref[...],
                           preferred_element_type=jnp.float32) + fb2_ref[...])
        h = jnp.dot(h, fw3_ref[...],
                    preferred_element_type=jnp.float32) + fb3_ref[...]
        out_ref[...] = _sigmoid(h)

    return kernel


_PARAM_ORDER = ["w1", "b1", "s1", "w2", "b2", "s2", "w3", "b3", "s3",
                "w4", "b4", "s4", "fw1", "fb1", "fw2", "fb2", "fw3", "fb3"]


def cnn_classifier_forward(x, kparams, cfg):
    B = x.shape[0]
    assert x.shape[1] == 1, "model expects a single input channel"
    x2d = x[:, 0, :].astype(jnp.float32)          # (B, dim_in)
    L0 = cfg["lengths"][0]
    nf = cfg["lengths"][4]
    Bb = cfg["batch_block"]
    assert B % Bb == 0, "batch must be a multiple of the batch block"

    args = [kparams[k] for k in _PARAM_ORDER]

    def full_spec(a):
        return pl.BlockSpec(a.shape, lambda i, _nd=a.ndim: (0,) * _nd)

    in_specs = ([pl.BlockSpec((Bb, L0), lambda i: (i, 0))]
                + [full_spec(a) for a in args])

    kernel = _make_kernel(cfg)
    return pl.pallas_call(
        kernel,
        out_shape=jax.ShapeDtypeStruct((B, nf), jnp.float32),
        grid=(B // Bb,),
        in_specs=in_specs,
        out_specs=pl.BlockSpec((Bb, nf), lambda i: (i, 0)),
        compiler_params=pltpu.CompilerParams(
            dimension_semantics=("parallel",)),
    )(x2d, *args)


def make_params(key, cfg):
    """Logical (PyTorch-layout) parameters."""
    K = cfg["mask_size"]
    chans = cfg["channels"]
    nn_, nf = cfg["num_neurons"], cfg["lengths"][4]
    keys = jax.random.split(key, 14)
    p, ki = {}, 0
    for blk in range(4):
        cin, cout = chans[blk], chans[blk + 1]
        p[f"w{blk+1}"] = 0.2 * jax.random.normal(keys[ki], (cout, cin, K),
                                                 jnp.float32); ki += 1
        p[f"b{blk+1}"] = 0.1 * jax.random.normal(keys[ki], (cout,),
                                                 jnp.float32); ki += 1
    for i, (din, dout) in enumerate([(nf, nn_), (nn_, nn_), (nn_, nf)]):
        p[f"fw{i+1}"] = 0.2 * jax.random.normal(keys[ki], (din, dout),
                                                jnp.float32); ki += 1
        p[f"fb{i+1}"] = 0.1 * jax.random.normal(keys[ki], (1, dout),
                                                jnp.float32); ki += 1
    return p


def pack_params(p, cfg, Bb):
    """Kernel-format parameters: batch-block-diagonal conv weights, bias
    columns, and 0/1 pooling-downsample selection matrices."""
    K, stride = cfg["mask_size"], cfg["stride_size"]
    chans, lens = cfg["channels"], cfg["lengths"]
    eye = jnp.eye(Bb, dtype=jnp.float32)
    kp = {}
    for blk in range(4):
        cin, cout = chans[blk], chans[blk + 1]
        w = p[f"w{blk+1}"]                       # (cout, cin, K)
        # Wk[(co*Bb + b), (ci*Bb + b')] = w[co, ci, k] * I[b, b']
        wexp = jnp.einsum("ock,bd->kobcd", w, eye).reshape(
            K, cout * Bb, cin * Bb)
        kp[f"w{blk+1}"] = wexp
        kp[f"b{blk+1}"] = jnp.repeat(p[f"b{blk+1}"], Bb)[:, None]  # (cout*Bb, 1)
        lc = lens[blk] - K + 1
        lm = lc - K + 1
        lp_ = lens[blk + 1]
        s = jnp.zeros((lm, lp_), jnp.float32)
        s = s.at[jnp.arange(lp_) * stride, jnp.arange(lp_)].set(1.0)
        kp[f"s{blk+1}"] = s
    for name in ("fw1", "fb1", "fw2", "fb2", "fw3", "fb3"):
        kp[name] = p[name]
    return kp


def reference_forward(x, p, cfg):
    """Pure-JAX reference with the PyTorch module's semantics (for validation)."""
    K, stride = cfg["mask_size"], cfg["stride_size"]
    lens = cfg["lengths"]
    act = x.astype(jnp.float32)                        # (B, 1, L0)
    for blk in range(4):
        lc = lens[blk] - K + 1
        w = p[f"w{blk+1}"]                             # (cout, cin, K)
        conv = jnp.zeros((act.shape[0], w.shape[0], lc), jnp.float32)
        for k in range(K):
            conv = conv + jnp.einsum("bcl,oc->bol", act[:, :, k:k + lc],
                                     w[:, :, k])
        conv = conv + p[f"b{blk+1}"][None, :, None]
        lm = lc - K + 1
        m = conv[:, :, 0:lm]
        for k in range(1, K):
            m = jnp.maximum(m, conv[:, :, k:k + lm])
        pooled = m[:, :, ::stride][:, :, :lens[blk + 1]]
        act = jnp.where(pooled >= 0, pooled, NEG_SLOPE * pooled)
    h = act[:, 0, :]
    h = jnp.dot(h, p["fw1"]) + p["fb1"]; h = jnp.where(h >= 0, h, NEG_SLOPE * h)
    h = jnp.dot(h, p["fw2"]) + p["fb2"]; h = jnp.where(h >= 0, h, NEG_SLOPE * h)
    h = jnp.dot(h, p["fw3"]) + p["fb3"]
    return jax.nn.sigmoid(h)


if __name__ == "__main__":
    # Small, forward-consistent hyperparameters.
    dim_in, num_neurons, num_channels = 256, 32, 4
    mask_size, stride_size, batch = 3, 2, 2

    # Length bookkeeping exactly as in the module's __init__.
    lens, L = [dim_in], dim_in
    for _ in range(4):
        Lc = L - mask_size + 1
        L = (Lc - mask_size) // stride_size + 1
        lens.append(L)

    batch_block = min(batch, 8)   # rows per grid step (channels*Bb fills sublanes)
    cfg = dict(batch=batch, batch_block=batch_block, mask_size=mask_size,
               stride_size=stride_size, num_neurons=num_neurons,
               channels=[1, num_channels, num_channels, num_channels, 1],
               lengths=lens)

    key = jax.random.PRNGKey(0)
    kx, kp = jax.random.split(key)
    x = jax.random.normal(kx, (batch, 1, dim_in), jnp.float32)
    params = make_params(kp, cfg)
    kparams = pack_params(params, cfg, batch_block)

    out = cnn_classifier_forward(x, kparams, cfg)
    out = jax.block_until_ready(out)

    ref = reference_forward(x, params, cfg)
    assert out.shape == (batch, lens[4])
    assert bool(jnp.all(jnp.isfinite(out)))
    assert jnp.allclose(out, ref, atol=1e-3, rtol=1e-3)
    print("KERNEL_OK")
</pallas_src>

<mosaic_0001>
module attributes {stable_mosaic.version = 11 : i64} {
  func.func @kernel(%arg0: i32, %arg1: memref<2x256xf32, #tpu.memory_space<vmem>>, %arg2: memref<3x8x2xf32, #tpu.memory_space<vmem>>, %arg3: memref<8x1xf32, #tpu.memory_space<vmem>>, %arg4: memref<252x126xf32, #tpu.memory_space<vmem>>, %arg5: memref<3x8x8xf32, #tpu.memory_space<vmem>>, %arg6: memref<8x1xf32, #tpu.memory_space<vmem>>, %arg7: memref<122x61xf32, #tpu.memory_space<vmem>>, %arg8: memref<3x8x8xf32, #tpu.memory_space<vmem>>, %arg9: memref<8x1xf32, #tpu.memory_space<vmem>>, %arg10: memref<57x29xf32, #tpu.memory_space<vmem>>, %arg11: memref<3x2x8xf32, #tpu.memory_space<vmem>>, %arg12: memref<2x1xf32, #tpu.memory_space<vmem>>, %arg13: memref<25x13xf32, #tpu.memory_space<vmem>>, %arg14: memref<13x32xf32, #tpu.memory_space<vmem>>, %arg15: memref<1x32xf32, #tpu.memory_space<vmem>>, %arg16: memref<32x32xf32, #tpu.memory_space<vmem>>, %arg17: memref<1x32xf32, #tpu.memory_space<vmem>>, %arg18: memref<32x13xf32, #tpu.memory_space<vmem>>, %arg19: memref<1x13xf32, #tpu.memory_space<vmem>>, %arg20: memref<2x13xf32, #tpu.memory_space<vmem>>) attributes {dimension_semantics = [#tpu.dimension_semantics<parallel>], iteration_bounds = array<i64: 1>, scalar_prefetch = 0 : i64, scratch_operands = 0 : i64, tpu.core_type = #tpu.core_type<tc>, window_params = [{transform_indices = @transform_0, window_bounds = array<i64: 2, 256>}, {pipeline_mode = #tpu.pipeline_mode<synchronous>, transform_indices = @transform_1, window_bounds = array<i64: 3, 8, 2>}, {pipeline_mode = #tpu.pipeline_mode<synchronous>, transform_indices = @transform_2, window_bounds = array<i64: 8, 1>}, {pipeline_mode = #tpu.pipeline_mode<synchronous>, transform_indices = @transform_3, window_bounds = array<i64: 252, 126>}, {pipeline_mode = #tpu.pipeline_mode<synchronous>, transform_indices = @transform_4, window_bounds = array<i64: 3, 8, 8>}, {pipeline_mode = #tpu.pipeline_mode<synchronous>, transform_indices = @transform_5, window_bounds = array<i64: 8, 1>}, {pipeline_mode = #tpu.pipeline_mode<synchronous>, transform_indices = @transform_6, window_bounds = array<i64: 122, 61>}, {pipeline_mode = #tpu.pipeline_mode<synchronous>, transform_indices = @transform_7, window_bounds = array<i64: 3, 8, 8>}, {pipeline_mode = #tpu.pipeline_mode<synchronous>, transform_indices = @transform_8, window_bounds = array<i64: 8, 1>}, {pipeline_mode = #tpu.pipeline_mode<synchronous>, transform_indices = @transform_9, window_bounds = array<i64: 57, 29>}, {pipeline_mode = #tpu.pipeline_mode<synchronous>, transform_indices = @transform_10, window_bounds = array<i64: 3, 2, 8>}, {pipeline_mode = #tpu.pipeline_mode<synchronous>, transform_indices = @transform_11, window_bounds = array<i64: 2, 1>}, {pipeline_mode = #tpu.pipeline_mode<synchronous>, transform_indices = @transform_12, window_bounds = array<i64: 25, 13>}, {pipeline_mode = #tpu.pipeline_mode<synchronous>, transform_indices = @transform_13, window_bounds = array<i64: 13, 32>}, {pipeline_mode = #tpu.pipeline_mode<synchronous>, transform_indices = @transform_14, window_bounds = array<i64: 1, 32>}, {pipeline_mode = #tpu.pipeline_mode<synchronous>, transform_indices = @transform_15, window_bounds = array<i64: 32, 32>}, {pipeline_mode = #tpu.pipeline_mode<synchronous>, transform_indices = @transform_16, window_bounds = array<i64: 1, 32>}, {pipeline_mode = #tpu.pipeline_mode<synchronous>, transform_indices = @transform_17, window_bounds = array<i64: 32, 13>}, {pipeline_mode = #tpu.pipeline_mode<synchronous>, transform_indices = @transform_18, window_bounds = array<i64: 1, 13>}, {transform_indices = @transform_19, window_bounds = array<i64: 2, 13>}]} {
    %c0 = arith.constant 0 : index
    %c0_0 = arith.constant 0 : index
    %0 = vector.load %arg1[%c0, %c0_0] : memref<2x256xf32, #tpu.memory_space<vmem>>, vector<2x256xf32>
    %c0_1 = arith.constant 0 : index
    %c0_2 = arith.constant 0 : index
    %c0_3 = arith.constant 0 : index
    %1 = vector.load %arg2[%c0_1, %c0_2, %c0_3] : memref<3x8x2xf32, #tpu.memory_space<vmem>>, vector<1x8x2xf32>
    %2 = vector.shape_cast %1 : vector<1x8x2xf32> to vector<8x2xf32>
    %3 = vector.extract_strided_slice %0 {offsets = [0, 0], sizes = [2, 254], strides = [1, 1]} : vector<2x256xf32> to vector<2x254xf32>
    %cst = arith.constant dense<0.000000e+00> : vector<8x254xf32>
    %4 = tpu.matmul %2, %3, %cst {dimension_numbers = #tpu.dot_dimension_numbers<[1], [0], [0], [1], [0, 0, 1, 1], [], []>} : vector<8x2xf32>, vector<2x254xf32>, vector<8x254xf32> -> vector<8x254xf32>
    %c1 = arith.constant 1 : index
    %c0_4 = arith.constant 0 : index
    %c0_5 = arith.constant 0 : index
    %5 = vector.load %arg2[%c1, %c0_4, %c0_5] : memref<3x8x2xf32, #tpu.memory_space<vmem>>, vector<1x8x2xf32>
    %6 = vector.shape_cast %5 : vector<1x8x2xf32> to vector<8x2xf32>
    %7 = vector.extract_strided_slice %0 {offsets = [0, 1], sizes = [2, 254], strides = [1, 1]} : vector<2x256xf32> to vector<2x254xf32>
    %cst_6 = arith.constant dense<0.000000e+00> : vector<8x254xf32>
    %8 = tpu.matmul %6, %7, %cst_6 {dimension_numbers = #tpu.dot_dimension_numbers<[1], [0], [0], [1], [0, 0, 1, 1], [], []>} : vector<8x2xf32>, vector<2x254xf32>, vector<8x254xf32> -> vector<8x254xf32>
    %9 = arith.addf %4, %8 : vector<8x254xf32>
    %c2 = arith.constant 2 : index
    %c0_7 = arith.constant 0 : index
    %c0_8 = arith.constant 0 : index
    %10 = vector.load %arg2[%c2, %c0_7, %c0_8] : memref<3x8x2xf32, #tpu.memory_space<vmem>>, vector<1x8x2xf32>
    %11 = vector.shape_cast %10 : vector<1x8x2xf32> to vector<8x2xf32>
    %12 = vector.extract_strided_slice %0 {offsets = [0, 2], sizes = [2, 254], strides = [1, 1]} : vector<2x256xf32> to vector<2x254xf32>
    %cst_9 = arith.constant dense<0.000000e+00> : vector<8x254xf32>
    %13 = tpu.matmul %11, %12, %cst_9 {dimension_numbers = #tpu.dot_dimension_numbers<[1], [0], [0], [1], [0, 0, 1, 1], [], []>} : vector<8x2xf32>, vector<2x254xf32>, vector<8x254xf32> -> vector<8x254xf32>
    %14 = arith.addf %9, %13 : vector<8x254xf32>
    %c0_10 = arith.constant 0 : index
    %c0_11 = arith.constant 0 : index
    %15 = vector.load %arg3[%c0_10, %c0_11] : memref<8x1xf32, #tpu.memory_space<vmem>>, vector<8x1xf32>
    %16 = vector.broadcast %15 : vector<8x1xf32> to vector<8x254xf32>
    %17 = arith.addf %14, %16 : vector<8x254xf32>
    %18 = vector.extract_strided_slice %17 {offsets = [0, 0], sizes = [8, 252], strides = [1, 1]} : vector<8x254xf32> to vector<8x252xf32>
    %19 = vector.extract_strided_slice %17 {offsets = [0, 1], sizes = [8, 252], strides = [1, 1]} : vector<8x254xf32> to vector<8x252xf32>
    %20 = arith.maximumf %18, %19 : vector<8x252xf32>
    %21 = vector.extract_strided_slice %17 {offsets = [0, 2], sizes = [8, 252], strides = [1, 1]} : vector<8x254xf32> to vector<8x252xf32>
    %22 = arith.maximumf %20, %21 : vector<8x252xf32>
    %c0_12 = arith.constant 0 : index
    %c0_13 = arith.constant 0 : index
    %23 = vector.load %arg4[%c0_12, %c0_13] : memref<252x126xf32, #tpu.memory_space<vmem>>, vector<252x126xf32>
    %cst_14 = arith.constant dense<0.000000e+00> : vector<8x126xf32>
    %24 = tpu.matmul %22, %23, %cst_14 {dimension_numbers = #tpu.dot_dimension_numbers<[1], [0], [0], [1], [0, 0, 1, 1], [], []>} : vector<8x252xf32>, vector<252x126xf32>, vector<8x126xf32> -> vector<8x126xf32>
    %cst_15 = arith.constant 0.000000e+00 : f32
    %25 = vector.broadcast %cst_15 : f32 to vector<8x126xf32>
    %26 = arith.cmpf oge, %24, %25 : vector<8x126xf32>
    %cst_16 = arith.constant 0.00999999977 : f32
    %27 = vector.broadcast %cst_16 : f32 to vector<8x126xf32>
    %28 = arith.mulf %27, %24 : vector<8x126xf32>
    %29 = arith.select %26, %24, %28 : vector<8x126xi1>, vector<8x126xf32>
    %c0_17 = arith.constant 0 : index
    %c0_18 = arith.constant 0 : index
    %c0_19 = arith.constant 0 : index
    %30 = vector.load %arg5[%c0_17, %c0_18, %c0_19] : memref<3x8x8xf32, #tpu.memory_space<vmem>>, vector<1x8x8xf32>
    %31 = vector.shape_cast %30 : vector<1x8x8xf32> to vector<8x8xf32>
    %32 = vector.extract_strided_slice %29 {offsets = [0, 0], sizes = [8, 124], strides = [1, 1]} : vector<8x126xf32> to vector<8x124xf32>
    %cst_20 = arith.constant dense<0.000000e+00> : vector<8x124xf32>
    %33 = tpu.matmul %31, %32, %cst_20 {dimension_numbers = #tpu.dot_dimension_numbers<[1], [0], [0], [1], [0, 0, 1, 1], [], []>} : vector<8x8xf32>, vector<8x124xf32>, vector<8x124xf32> -> vector<8x124xf32>
    %c1_21 = arith.constant 1 : index
    %c0_22 = arith.constant 0 : index
    %c0_23 = arith.constant 0 : index
    %34 = vector.load %arg5[%c1_21, %c0_22, %c0_23] : memref<3x8x8xf32, #tpu.memory_space<vmem>>, vector<1x8x8xf32>
    %35 = vector.shape_cast %34 : vector<1x8x8xf32> to vector<8x8xf32>
    %36 = vector.extract_strided_slice %29 {offsets = [0, 1], sizes = [8, 124], strides = [1, 1]} : vector<8x126xf32> to vector<8x124xf32>
    %cst_24 = arith.constant dense<0.000000e+00> : vector<8x124xf32>
    %37 = tpu.matmul %35, %36, %cst_24 {dimension_numbers = #tpu.dot_dimension_numbers<[1], [0], [0], [1], [0, 0, 1, 1], [], []>} : vector<8x8xf32>, vector<8x124xf32>, vector<8x124xf32> -> vector<8x124xf32>
    %38 = arith.addf %33, %37 : vector<8x124xf32>
    %c2_25 = arith.constant 2 : index
    %c0_26 = arith.constant 0 : index
    %c0_27 = arith.constant 0 : index
    %39 = vector.load %arg5[%c2_25, %c0_26, %c0_27] : memref<3x8x8xf32, #tpu.memory_space<vmem>>, vector<1x8x8xf32>
    %40 = vector.shape_cast %39 : vector<1x8x8xf32> to vector<8x8xf32>
    %41 = vector.extract_strided_slice %29 {offsets = [0, 2], sizes = [8, 124], strides = [1, 1]} : vector<8x126xf32> to vector<8x124xf32>
    %cst_28 = arith.constant dense<0.000000e+00> : vector<8x124xf32>
    %42 = tpu.matmul %40, %41, %cst_28 {dimension_numbers = #tpu.dot_dimension_numbers<[1], [0], [0], [1], [0, 0, 1, 1], [], []>} : vector<8x8xf32>, vector<8x124xf32>, vector<8x124xf32> -> vector<8x124xf32>
    %43 = arith.addf %38, %42 : vector<8x124xf32>
    %c0_29 = arith.constant 0 : index
    %c0_30 = arith.constant 0 : index
    %44 = vector.load %arg6[%c0_29, %c0_30] : memref<8x1xf32, #tpu.memory_space<vmem>>, vector<8x1xf32>
    %45 = vector.broadcast %44 : vector<8x1xf32> to vector<8x124xf32>
    %46 = arith.addf %43, %45 : vector<8x124xf32>
    %47 = vector.extract_strided_slice %46 {offsets = [0, 0], sizes = [8, 122], strides = [1, 1]} : vector<8x124xf32> to vector<8x122xf32>
    %48 = vector.extract_strided_slice %46 {offsets = [0, 1], sizes = [8, 122], strides = [1, 1]} : vector<8x124xf32> to vector<8x122xf32>
    %49 = arith.maximumf %47, %48 : vector<8x122xf32>
    %50 = vector.extract_strided_slice %46 {offsets = [0, 2], sizes = [8, 122], strides = [1, 1]} : vector<8x124xf32> to vector<8x122xf32>
    %51 = arith.maximumf %49, %50 : vector<8x122xf32>
    %c0_31 = arith.constant 0 : index
    %c0_32 = arith.constant 0 : index
    %52 = vector.load %arg7[%c0_31, %c0_32] : memref<122x61xf32, #tpu.memory_space<vmem>>, vector<122x61xf32>
    %cst_33 = arith.constant dense<0.000000e+00> : vector<8x61xf32>
    %53 = tpu.matmul %51, %52, %cst_33 {dimension_numbers = #tpu.dot_dimension_numbers<[1], [0], [0], [1], [0, 0, 1, 1], [], []>} : vector<8x122xf32>, vector<122x61xf32>, vector<8x61xf32> -> vector<8x61xf32>
    %cst_34 = arith.constant 0.000000e+00 : f32
    %54 = vector.broadcast %cst_34 : f32 to vector<8x61xf32>
    %55 = arith.cmpf oge, %53, %54 : vector<8x61xf32>
    %cst_35 = arith.constant 0.00999999977 : f32
    %56 = vector.broadcast %cst_35 : f32 to vector<8x61xf32>
    %57 = arith.mulf %56, %53 : vector<8x61xf32>
    %58 = arith.select %55, %53, %57 : vector<8x61xi1>, vector<8x61xf32>
    %c0_36 = arith.constant 0 : index
    %c0_37 = arith.constant 0 : index
    %c0_38 = arith.constant 0 : index
    %59 = vector.load %arg8[%c0_36, %c0_37, %c0_38] : memref<3x8x8xf32, #tpu.memory_space<vmem>>, vector<1x8x8xf32>
    %60 = vector.shape_cast %59 : vector<1x8x8xf32> to vector<8x8xf32>
    %61 = vector.extract_strided_slice %58 {offsets = [0, 0], sizes = [8, 59], strides = [1, 1]} : vector<8x61xf32> to vector<8x59xf32>
    %cst_39 = arith.constant dense<0.000000e+00> : vector<8x59xf32>
    %62 = tpu.matmul %60, %61, %cst_39 {dimension_numbers = #tpu.dot_dimension_numbers<[1], [0], [0], [1], [0, 0, 1, 1], [], []>} : vector<8x8xf32>, vector<8x59xf32>, vector<8x59xf32> -> vector<8x59xf32>
    %c1_40 = arith.constant 1 : index
    %c0_41 = arith.constant 0 : index
    %c0_42 = arith.constant 0 : index
    %63 = vector.load %arg8[%c1_40, %c0_41, %c0_42] : memref<3x8x8xf32, #tpu.memory_space<vmem>>, vector<1x8x8xf32>
    %64 = vector.shape_cast %63 : vector<1x8x8xf32> to vector<8x8xf32>
    %65 = vector.extract_strided_slice %58 {offsets = [0, 1], sizes = [8, 59], strides = [1, 1]} : vector<8x61xf32> to vector<8x59xf32>
    %cst_43 = arith.constant dense<0.000000e+00> : vector<8x59xf32>
    %66 = tpu.matmul %64, %65, %cst_43 {dimension_numbers = #tpu.dot_dimension_numbers<[1], [0], [0], [1], [0, 0, 1, 1], [], []>} : vector<8x8xf32>, vector<8x59xf32>, vector<8x59xf32> -> vector<8x59xf32>
    %67 = arith.addf %62, %66 : vector<8x59xf32>
    %c2_44 = arith.constant 2 : index
    %c0_45 = arith.constant 0 : index
    %c0_46 = arith.constant 0 : index
    %68 = vector.load %arg8[%c2_44, %c0_45, %c0_46] : memref<3x8x8xf32, #tpu.memory_space<vmem>>, vector<1x8x8xf32>
    %69 = vector.shape_cast %68 : vector<1x8x8xf32> to vector<8x8xf32>
    %70 = vector.extract_strided_slice %58 {offsets = [0, 2], sizes = [8, 59], strides = [1, 1]} : vector<8x61xf32> to vector<8x59xf32>
    %cst_47 = arith.constant dense<0.000000e+00> : vector<8x59xf32>
    %71 = tpu.matmul %69, %70, %cst_47 {dimension_numbers = #tpu.dot_dimension_numbers<[1], [0], [0], [1], [0, 0, 1, 1], [], []>} : vector<8x8xf32>, vector<8x59xf32>, vector<8x59xf32> -> vector<8x59xf32>
    %72 = arith.addf %67, %71 : vector<8x59xf32>
    %c0_48 = arith.constant 0 : index
    %c0_49 = arith.constant 0 : index
    %73 = vector.load %arg9[%c0_48, %c0_49] : memref<8x1xf32, #tpu.memory_space<vmem>>, vector<8x1xf32>
    %74 = vector.broadcast %73 : vector<8x1xf32> to vector<8x59xf32>
    %75 = arith.addf %72, %74 : vector<8x59xf32>
    %76 = vector.extract_strided_slice %75 {offsets = [0, 0], sizes = [8, 57], strides = [1, 1]} : vector<8x59xf32> to vector<8x57xf32>
    %77 = vector.extract_strided_slice %75 {offsets = [0, 1], sizes = [8, 57], strides = [1, 1]} : vector<8x59xf32> to vector<8x57xf32>
    %78 = arith.maximumf %76, %77 : vector<8x57xf32>
    %79 = vector.extract_strided_slice %75 {offsets = [0, 2], sizes = [8, 57], strides = [1, 1]} : vector<8x59xf32> to vector<8x57xf32>
    %80 = arith.maximumf %78, %79 : vector<8x57xf32>
    %c0_50 = arith.constant 0 : index
    %c0_51 = arith.constant 0 : index
    %81 = vector.load %arg10[%c0_50, %c0_51] : memref<57x29xf32, #tpu.memory_space<vmem>>, vector<57x29xf32>
    %cst_52 = arith.constant dense<0.000000e+00> : vector<8x29xf32>
    %82 = tpu.matmul %80, %81, %cst_52 {dimension_numbers = #tpu.dot_dimension_numbers<[1], [0], [0], [1], [0, 0, 1, 1], [], []>} : vector<8x57xf32>, vector<57x29xf32>, vector<8x29xf32> -> vector<8x29xf32>
    %cst_53 = arith.constant 0.000000e+00 : f32
    %83 = vector.broadcast %cst_53 : f32 to vector<8x29xf32>
    %84 = arith.cmpf oge, %82, %83 : vector<8x29xf32>
    %cst_54 = arith.constant 0.00999999977 : f32
    %85 = vector.broadcast %cst_54 : f32 to vector<8x29xf32>
    %86 = arith.mulf %85, %82 : vector<8x29xf32>
    %87 = arith.select %84, %82, %86 : vector<8x29xi1>, vector<8x29xf32>
    %c0_55 = arith.constant 0 : index
    %c0_56 = arith.constant 0 : index
    %c0_57 = arith.constant 0 : index
    %88 = vector.load %arg11[%c0_55, %c0_56, %c0_57] : memref<3x2x8xf32, #tpu.memory_space<vmem>>, vector<1x2x8xf32>
    %89 = vector.shape_cast %88 : vector<1x2x8xf32> to vector<2x8xf32>
    %90 = vector.extract_strided_slice %87 {offsets = [0, 0], sizes = [8, 27], strides = [1, 1]} : vector<8x29xf32> to vector<8x27xf32>
    %cst_58 = arith.constant dense<0.000000e+00> : vector<2x27xf32>
    %91 = tpu.matmul %89, %90, %cst_58 {dimension_numbers = #tpu.dot_dimension_numbers<[1], [0], [0], [1], [0, 0, 1, 1], [], []>} : vector<2x8xf32>, vector<8x27xf32>, vector<2x27xf32> -> vector<2x27xf32>
    %c1_59 = arith.constant 1 : index
    %c0_60 = arith.constant 0 : index
    %c0_61 = arith.constant 0 : index
    %92 = vector.load %arg11[%c1_59, %c0_60, %c0_61] : memref<3x2x8xf32, #tpu.memory_space<vmem>>, vector<1x2x8xf32>
    %93 = vector.shape_cast %92 : vector<1x2x8xf32> to vector<2x8xf32>
    %94 = vector.extract_strided_slice %87 {offsets = [0, 1], sizes = [8, 27], strides = [1, 1]} : vector<8x29xf32> to vector<8x27xf32>
    %cst_62 = arith.constant dense<0.000000e+00> : vector<2x27xf32>
    %95 = tpu.matmul %93, %94, %cst_62 {dimension_numbers = #tpu.dot_dimension_numbers<[1], [0], [0], [1], [0, 0, 1, 1], [], []>} : vector<2x8xf32>, vector<8x27xf32>, vector<2x27xf32> -> vector<2x27xf32>
    %96 = arith.addf %91, %95 : vector<2x27xf32>
    %c2_63 = arith.constant 2 : index
    %c0_64 = arith.constant 0 : index
    %c0_65 = arith.constant 0 : index
    %97 = vector.load %arg11[%c2_63, %c0_64, %c0_65] : memref<3x2x8xf32, #tpu.memory_space<vmem>>, vector<1x2x8xf32>
    %98 = vector.shape_cast %97 : vector<1x2x8xf32> to vector<2x8xf32>
    %99 = vector.extract_strided_slice %87 {offsets = [0, 2], sizes = [8, 27], strides = [1, 1]} : vector<8x29xf32> to vector<8x27xf32>
    %cst_66 = arith.constant dense<0.000000e+00> : vector<2x27xf32>
    %100 = tpu.matmul %98, %99, %cst_66 {dimension_numbers = #tpu.dot_dimension_numbers<[1], [0], [0], [1], [0, 0, 1, 1], [], []>} : vector<2x8xf32>, vector<8x27xf32>, vector<2x27xf32> -> vector<2x27xf32>
    %101 = arith.addf %96, %100 : vector<2x27xf32>
    %c0_67 = arith.constant 0 : index
    %c0_68 = arith.constant 0 : index
    %102 = vector.load %arg12[%c0_67, %c0_68] : memref<2x1xf32, #tpu.memory_space<vmem>>, vector<2x1xf32>
    %103 = vector.broadcast %102 : vector<2x1xf32> to vector<2x27xf32>
    %104 = arith.addf %101, %103 : vector<2x27xf32>
    %105 = vector.extract_strided_slice %104 {offsets = [0, 0], sizes = [2, 25], strides = [1, 1]} : vector<2x27xf32> to vector<2x25xf32>
    %106 = vector.extract_strided_slice %104 {offsets = [0, 1], sizes = [2, 25], strides = [1, 1]} : vector<2x27xf32> to vector<2x25xf32>
    %107 = arith.maximumf %105, %106 : vector<2x25xf32>
    %108 = vector.extract_strided_slice %104 {offsets = [0, 2], sizes = [2, 25], strides = [1, 1]} : vector<2x27xf32> to vector<2x25xf32>
    %109 = arith.maximumf %107, %108 : vector<2x25xf32>
    %c0_69 = arith.constant 0 : index
    %c0_70 = arith.constant 0 : index
    %110 = vector.load %arg13[%c0_69, %c0_70] : memref<25x13xf32, #tpu.memory_space<vmem>>, vector<25x13xf32>
    %cst_71 = arith.constant dense<0.000000e+00> : vector<2x13xf32>
    %111 = tpu.matmul %109, %110, %cst_71 {dimension_numbers = #tpu.dot_dimension_numbers<[1], [0], [0], [1], [0, 0, 1, 1], [], []>} : vector<2x25xf32>, vector<25x13xf32>, vector<2x13xf32> -> vector<2x13xf32>
    %cst_72 = arith.constant 0.000000e+00 : f32
    %112 = vector.broadcast %cst_72 : f32 to vector<2x13xf32>
    %113 = arith.cmpf oge, %111, %112 : vector<2x13xf32>
    %cst_73 = arith.constant 0.00999999977 : f32
    %114 = vector.broadcast %cst_73 : f32 to vector<2x13xf32>
    %115 = arith.mulf %114, %111 : vector<2x13xf32>
    %116 = arith.select %113, %111, %115 : vector<2x13xi1>, vector<2x13xf32>
    %c0_74 = arith.constant 0 : index
    %c0_75 = arith.constant 0 : index
    %117 = vector.load %arg14[%c0_74, %c0_75] : memref<13x32xf32, #tpu.memory_space<vmem>>, vector<13x32xf32>
    %cst_76 = arith.constant dense<0.000000e+00> : vector<2x32xf32>
    %118 = tpu.matmul %116, %117, %cst_76 {dimension_numbers = #tpu.dot_dimension_numbers<[1], [0], [0], [1], [0, 0, 1, 1], [], []>} : vector<2x13xf32>, vector<13x32xf32>, vector<2x32xf32> -> vector<2x32xf32>
    %c0_77 = arith.constant 0 : index
    %c0_78 = arith.constant 0 : index
    %119 = vector.load %arg15[%c0_77, %c0_78] : memref<1x32xf32, #tpu.memory_space<vmem>>, vector<1x32xf32>
    %120 = vector.broadcast %119 : vector<1x32xf32> to vector<2x32xf32>
    %121 = arith.addf %118, %120 : vector<2x32xf32>
    %cst_79 = arith.constant 0.000000e+00 : f32
    %122 = vector.broadcast %cst_79 : f32 to vector<2x32xf32>
    %123 = arith.cmpf oge, %121, %122 : vector<2x32xf32>
    %cst_80 = arith.constant 0.00999999977 : f32
    %124 = vector.broadcast %cst_80 : f32 to vector<2x32xf32>
    %125 = arith.mulf %124, %121 : vector<2x32xf32>
    %126 = arith.select %123, %121, %125 : vector<2x32xi1>, vector<2x32xf32>
    %c0_81 = arith.constant 0 : index
    %c0_82 = arith.constant 0 : index
    %127 = vector.load %arg16[%c0_81, %c0_82] : memref<32x32xf32, #tpu.memory_space<vmem>>, vector<32x32xf32>
    %cst_83 = arith.constant dense<0.000000e+00> : vector<2x32xf32>
    %128 = tpu.matmul %126, %127, %cst_83 {dimension_numbers = #tpu.dot_dimension_numbers<[1], [0], [0], [1], [0, 0, 1, 1], [], []>} : vector<2x32xf32>, vector<32x32xf32>, vector<2x32xf32> -> vector<2x32xf32>
    %c0_84 = arith.constant 0 : index
    %c0_85 = arith.constant 0 : index
    %129 = vector.load %arg17[%c0_84, %c0_85] : memref<1x32xf32, #tpu.memory_space<vmem>>, vector<1x32xf32>
    %130 = vector.broadcast %129 : vector<1x32xf32> to vector<2x32xf32>
    %131 = arith.addf %128, %130 : vector<2x32xf32>
    %cst_86 = arith.constant 0.000000e+00 : f32
    %132 = vector.broadcast %cst_86 : f32 to vector<2x32xf32>
    %133 = arith.cmpf oge, %131, %132 : vector<2x32xf32>
    %cst_87 = arith.constant 0.00999999977 : f32
    %134 = vector.broadcast %cst_87 : f32 to vector<2x32xf32>
    %135 = arith.mulf %134, %131 : vector<2x32xf32>
    %136 = arith.select %133, %131, %135 : vector<2x32xi1>, vector<2x32xf32>
    %c0_88 = arith.constant 0 : index
    %c0_89 = arith.constant 0 : index
    %137 = vector.load %arg18[%c0_88, %c0_89] : memref<32x13xf32, #tpu.memory_space<vmem>>, vector<32x13xf32>
    %cst_90 = arith.constant dense<0.000000e+00> : vector<2x13xf32>
    %138 = tpu.matmul %136, %137, %cst_90 {dimension_numbers = #tpu.dot_dimension_numbers<[1], [0], [0], [1], [0, 0, 1, 1], [], []>} : vector<2x32xf32>, vector<32x13xf32>, vector<2x13xf32> -> vector<2x13xf32>
    %c0_91 = arith.constant 0 : index
    %c0_92 = arith.constant 0 : index
    %139 = vector.load %arg19[%c0_91, %c0_92] : memref<1x13xf32, #tpu.memory_space<vmem>>, vector<1x13xf32>
    %140 = vector.broadcast %139 : vector<1x13xf32> to vector<2x13xf32>
    %141 = arith.addf %138, %140 : vector<2x13xf32>
    %142 = math.absf %141 : vector<2x13xf32>
    %cst_93 = arith.constant 0.000000e+00 : f32
    %143 = vector.broadcast %cst_93 : f32 to vector<2x13xf32>
    %144 = arith.subf %143, %142 : vector<2x13xf32>
    %145 = math.exp %144 : vector<2x13xf32>
    %cst_94 = arith.constant 1.000000e+00 : f32
    %146 = vector.broadcast %cst_94 : f32 to vector<2x13xf32>
    %147 = arith.addf %146, %145 : vector<2x13xf32>
    %cst_95 = arith.constant 1.000000e+00 : f32
    %148 = vector.broadcast %cst_95 : f32 to vector<2x13xf32>
    %149 = arith.divf %148, %147 : vector<2x13xf32>
    %cst_96 = arith.constant 0.000000e+00 : f32
    %150 = vector.broadcast %cst_96 : f32 to vector<2x13xf32>
    %151 = arith.cmpf oge, %141, %150 : vector<2x13xf32>
    %152 = arith.mulf %145, %149 : vector<2x13xf32>
    %153 = arith.select %151, %149, %152 : vector<2x13xi1>, vector<2x13xf32>
    %c0_97 = arith.constant 0 : index
    %c0_98 = arith.constant 0 : index
    %154 = vector.load %arg20[%c0_97, %c0_98] : memref<2x13xf32, #tpu.memory_space<vmem>>, vector<2x13xf32>
    tpu.vector_store %arg20[%c0_97, %c0_98], %153 {strides = array<i32>} : memref<2x13xf32, #tpu.memory_space<vmem>>, vector<2x13xf32>,
    return
  }
  func.func @transform_0(%arg0: i32) -> (i32, i32) {
    %c0_i32 = arith.constant 0 : i32
    %c0_i32_0 = arith.constant 0 : i32
    return %arg0, %c0_i32 : i32, i32
  }
  func.func @transform_1(%arg0: i32) -> (i32, i32, i32) {
    %c0_i32 = arith.constant 0 : i32
    %c0_i32_0 = arith.constant 0 : i32
    %c0_i32_1 = arith.constant 0 : i32
    %c0_i32_2 = arith.constant 0 : i32
    return %c0_i32, %c0_i32_0, %c0_i32_1 : i32, i32, i32
  }
  func.func @transform_2(%arg0: i32) -> (i32, i32) {
    %c0_i32 = arith.constant 0 : i32
    %c0_i32_0 = arith.constant 0 : i32
    %c0_i32_1 = arith.constant 0 : i32
    return %c0_i32, %c0_i32_0 : i32, i32
  }
  func.func @transform_3(%arg0: i32) -> (i32, i32) {
    %c0_i32 = arith.constant 0 : i32
    %c0_i32_0 = arith.constant 0 : i32
    %c0_i32_1 = arith.constant 0 : i32
    return %c0_i32, %c0_i32_0 : i32, i32
  }
  func.func @transform_4(%arg0: i32) -> (i32, i32, i32) {
    %c0_i32 = arith.constant 0 : i32
    %c0_i32_0 = arith.constant 0 : i32
    %c0_i32_1 = arith.constant 0 : i32
    %c0_i32_2 = arith.constant 0 : i32
    return %c0_i32, %c0_i32_0, %c0_i32_1 : i32, i32, i32
  }
  func.func @transform_5(%arg0: i32) -> (i32, i32) {
    %c0_i32 = arith.constant 0 : i32
    %c0_i32_0 = arith.constant 0 : i32
    %c0_i32_1 = arith.constant 0 : i32
    return %c0_i32, %c0_i32_0 : i32, i32
  }
  func.func @transform_6(%arg0: i32) -> (i32, i32) {
    %c0_i32 = arith.constant 0 : i32
    %c0_i32_0 = arith.constant 0 : i32
    %c0_i32_1 = arith.constant 0 : i32
    return %c0_i32, %c0_i32_0 : i32, i32
  }
  func.func @transform_7(%arg0: i32) -> (i32, i32, i32) {
    %c0_i32 = arith.constant 0 : i32
    %c0_i32_0 = arith.constant 0 : i32
    %c0_i32_1 = arith.constant 0 : i32
    %c0_i32_2 = arith.constant 0 : i32
    return %c0_i32, %c0_i32_0, %c0_i32_1 : i32, i32, i32
  }
  func.func @transform_8(%arg0: i32) -> (i32, i32) {
    %c0_i32 = arith.constant 0 : i32
    %c0_i32_0 = arith.constant 0 : i32
    %c0_i32_1 = arith.constant 0 : i32
    return %c0_i32, %c0_i32_0 : i32, i32
  }
  func.func @transform_9(%arg0: i32) -> (i32, i32) {
    %c0_i32 = arith.constant 0 : i32
    %c0_i32_0 = arith.constant 0 : i32
    %c0_i32_1 = arith.constant 0 : i32
    return %c0_i32, %c0_i32_0 : i32, i32
  }
  func.func @transform_10(%arg0: i32) -> (i32, i32, i32) {
    %c0_i32 = arith.constant 0 : i32
    %c0_i32_0 = arith.constant 0 : i32
    %c0_i32_1 = arith.constant 0 : i32
    %c0_i32_2 = arith.constant 0 : i32
    return %c0_i32, %c0_i32_0, %c0_i32_1 : i32, i32, i32
  }
  func.func @transform_11(%arg0: i32) -> (i32, i32) {
    %c0_i32 = arith.constant 0 : i32
    %c0_i32_0 = arith.constant 0 : i32
    %c0_i32_1 = arith.constant 0 : i32
    return %c0_i32, %c0_i32_0 : i32, i32
  }
  func.func @transform_12(%arg0: i32) -> (i32, i32) {
    %c0_i32 = arith.constant 0 : i32
    %c0_i32_0 = arith.constant 0 : i32
    %c0_i32_1 = arith.constant 0 : i32
    return %c0_i32, %c0_i32_0 : i32, i32
  }
  func.func @transform_13(%arg0: i32) -> (i32, i32) {
    %c0_i32 = arith.constant 0 : i32
    %c0_i32_0 = arith.constant 0 : i32
    %c0_i32_1 = arith.constant 0 : i32
    return %c0_i32, %c0_i32_0 : i32, i32
  }
  func.func @transform_14(%arg0: i32) -> (i32, i32) {
    %c0_i32 = arith.constant 0 : i32
    %c0_i32_0 = arith.constant 0 : i32
    %c0_i32_1 = arith.constant 0 : i32
    return %c0_i32, %c0_i32_0 : i32, i32
  }
  func.func @transform_15(%arg0: i32) -> (i32, i32) {
    %c0_i32 = arith.constant 0 : i32
    %c0_i32_0 = arith.constant 0 : i32
    %c0_i32_1 = arith.constant 0 : i32
    return %c0_i32, %c0_i32_0 : i32, i32
  }
  func.func @transform_16(%arg0: i32) -> (i32, i32) {
    %c0_i32 = arith.constant 0 : i32
    %c0_i32_0 = arith.constant 0 : i32
    %c0_i32_1 = arith.constant 0 : i32
    return %c0_i32, %c0_i32_0 : i32, i32
  }
  func.func @transform_17(%arg0: i32) -> (i32, i32) {
    %c0_i32 = arith.constant 0 : i32
    %c0_i32_0 = arith.constant 0 : i32
    %c0_i32_1 = arith.constant 0 : i32
    return %c0_i32, %c0_i32_0 : i32, i32
  }
  func.func @transform_18(%arg0: i32) -> (i32, i32) {
    %c0_i32 = arith.constant 0 : i32
    %c0_i32_0 = arith.constant 0 : i32
    %c0_i32_1 = arith.constant 0 : i32
    return %c0_i32, %c0_i32_0 : i32, i32
  }
  func.func @transform_19(%arg0: i32) -> (i32, i32) {
    %c0_i32 = arith.constant 0 : i32
    %c0_i32_0 = arith.constant 0 : i32
    return %arg0, %c0_i32 : i32, i32
  }
}

</mosaic_0001>

<llo_original>
// kernel: tpu_custom_call.1
$region0: #{tpu_custom_call.1}
  #allocation0 [shape = 'u32[]', space=smem, size = 0x4, offset = 0x4, fixed_abs, tag = 'smem constant byte address 0x4 - core index']
  #allocation1 [shape = 'u32[144,128]{1,0:T(1,128)}', space=vmem, size = 0x12000, scoped, tag = 'internal scratch']
  %s0 = inlined_call_operand.hbm [shape: f32[2,256], index: 0, kind: input, shape index: {}]
  %s1 = inlined_call_operand.vmem [shape: f32[3,8,2], index: 1, kind: input, shape index: {}]
  %s2 = inlined_call_operand.vmem [shape: f32[8,1], index: 2, kind: input, shape index: {}]
  %s3 = inlined_call_operand.vmem [shape: f32[252,126], index: 3, kind: input, shape index: {}]
  %s4 = inlined_call_operand.vmem [shape: f32[3,8,8], index: 4, kind: input, shape index: {}]
  %s5 = inlined_call_operand.vmem [shape: f32[8,1], index: 5, kind: input, shape index: {}]
  %s6 = inlined_call_operand.vmem [shape: f32[122,61], index: 6, kind: input, shape index: {}]
  %s7 = inlined_call_operand.vmem [shape: f32[3,8,8], index: 7, kind: input, shape index: {}]
  %s8 = inlined_call_operand.vmem [shape: f32[8,1], index: 8, kind: input, shape index: {}]
  %s9 = inlined_call_operand.vmem [shape: f32[57,29], index: 9, kind: input, shape index: {}]
  %s10 = inlined_call_operand.vmem [shape: f32[3,2,8], index: 10, kind: input, shape index: {}]
  %s11 = inlined_call_operand.vmem [shape: f32[2,1], index: 11, kind: input, shape index: {}]
  %s12 = inlined_call_operand.vmem [shape: f32[25,13], index: 12, kind: input, shape index: {}]
  %s13 = inlined_call_operand.vmem [shape: f32[13,32], index: 13, kind: input, shape index: {}]
  %s14 = inlined_call_operand.vmem [shape: f32[1,32], index: 14, kind: input, shape index: {}]
  %s15 = inlined_call_operand.vmem [shape: f32[32,32], index: 15, kind: input, shape index: {}]
  %s16 = inlined_call_operand.vmem [shape: f32[1,32], index: 16, kind: input, shape index: {}]
  %s17 = inlined_call_operand.vmem [shape: f32[32,13], index: 17, kind: input, shape index: {}]
  %s18 = inlined_call_operand.vmem [shape: f32[1,13], index: 18, kind: input, shape index: {}]
  %s19 = inlined_call_operand.hbm [shape: f32[2,13], index: 19, kind: output, shape index: {}]
  %s20 = sld [smem:[#allocation0]]
  $region90: #{tpu_custom_call.1} parent=0
    _
  %s22 = ssub.s32 1, %s20
  %s23 = scalar_select 0, %s22, %s20
  $region1: #{tpu_custom_call.1} parent=0
    #allocation2 [shape = 'u8[2048]{0}', space=vmem, size = 0x800, scoped, tag = 'input window, operand 0, single buffered']
    #allocation3 [shape = 's32[1]{0}', space=sflag, size = 0x4, scoped, tag = 'scoped memory for tpu_custom_call.1']
    #allocation4 [shape = 's32[1]{0}', space=sflag, size = 0x4, scoped, tag = 'scoped memory for tpu_custom_call.1']
    #allocation5 [shape = 'u8[1024]{0}', space=vmem, size = 0x400, scoped, tag = 'output window, operand 0, single buffered']
    %24 = vsyncpa [#allocation3], 0
    %25 = vsyncpa [#allocation4], 0
    // Predicated region
    $region2: #{tpu_custom_call.1} parent=1 // pred_check
      _
    $region3: #{tpu_custom_call.1} parent=1 // pred_check_branch
      %27 = sbr.rel (0) target = $region5
    $region4: #{tpu_custom_call.1} parent=1 // pred_region
      %s29 = ssub.s32 64, 64
      %30 = vsyncadd [#allocation3], %s29
      %s32 = sshll.u32 [#allocation2], 4
      %s33 = int_to_ptr.vmem [resolvable:$true] %s32
      %35 = dma.hbm_to_vmem [thread:$0]  %s0, 64, %s33, [#allocation3]
    $region5: #{tpu_custom_call.1} parent=1 // pred_fallthru
      _
    // Predicated region
    $region6: #{tpu_custom_call.1} parent=1 // pred_check
      _
    $region7: #{tpu_custom_call.1} parent=1 // pred_check_branch
      %37 = sbr.rel (0) target = $region9
    $region8: #{tpu_custom_call.1} parent=1 // pred_region
      _
    $region9: #{tpu_custom_call.1} parent=1 // pred_fallthru
      _
    // Predicated region
    $region10: #{tpu_custom_call.1} parent=1 // pred_check
      _
    $region11: #{tpu_custom_call.1} parent=1 // pred_check_branch
      %39 = sbr.rel (0) target = $region13
    $region12: #{tpu_custom_call.1} parent=1 // pred_region
      _
    $region13: #{tpu_custom_call.1} parent=1 // pred_fallthru
      _
    // Predicated region
    $region14: #{tpu_custom_call.1} parent=1 // pred_check
      _
    $region15: #{tpu_custom_call.1} parent=1 // pred_check_branch
      %41 = sbr.rel (0) target = $region17
    $region16: #{tpu_custom_call.1} parent=1 // pred_region
      _
    $region17: #{tpu_custom_call.1} parent=1 // pred_fallthru
      _
    // Predicated region
    $region18: #{tpu_custom_call.1} parent=1 // pred_check
      _
    $region19: #{tpu_custom_call.1} parent=1 // pred_check_branch
      %43 = sbr.rel (0) target = $region21
    $region20: #{tpu_custom_call.1} parent=1 // pred_region
      _
    $region21: #{tpu_custom_call.1} parent=1 // pred_fallthru
      _
    // Predicated region
    $region22: #{tpu_custom_call.1} parent=1 // pred_check
      _
    $region23: #{tpu_custom_call.1} parent=1 // pred_check_branch
      %45 = sbr.rel (0) target = $region25
    $region24: #{tpu_custom_call.1} parent=1 // pred_region
      _
    $region25: #{tpu_custom_call.1} parent=1 // pred_fallthru
      _
    // Predicated region
    $region26: #{tpu_custom_call.1} parent=1 // pred_check
      _
    $region27: #{tpu_custom_call.1} parent=1 // pred_check_branch
      %47 = sbr.rel (0) target = $region29
    $region28: #{tpu_custom_call.1} parent=1 // pred_region
      _
    $region29: #{tpu_custom_call.1} parent=1 // pred_fallthru
      _
    // Predicated region
    $region30: #{tpu_custom_call.1} parent=1 // pred_check
      _
    $region31: #{tpu_custom_call.1} parent=1 // pred_check_branch
      %49 = sbr.rel (0) target = $region33
    $region32: #{tpu_custom_call.1} parent=1 // pred_region
      _
    $region33: #{tpu_custom_call.1} parent=1 // pred_fallthru
      _
    // Predicated region
    $region34: #{tpu_custom_call.1} parent=1 // pred_check
      _
    $region35: #{tpu_custom_call.1} parent=1 // pred_check_branch
      %51 = sbr.rel (0) target = $region37
    $region36: #{tpu_custom_call.1} parent=1 // pred_region
      _
    $region37: #{tpu_custom_call.1} parent=1 // pred_fallthru
      _
    // Predicated region
    $region38: #{tpu_custom_call.1} parent=1 // pred_check
      _
    $region39: #{tpu_custom_call.1} parent=1 // pred_check_branch
      %53 = sbr.rel (0) target = $region41
    $region40: #{tpu_custom_call.1} parent=1 // pred_region
      _
    $region41: #{tpu_custom_call.1} parent=1 // pred_fallthru
      _
    // Predicated region
    $region42: #{tpu_custom_call.1} parent=1 // pred_check
      _
    $region43: #{tpu_custom_call.1} parent=1 // pred_check_branch
      %55 = sbr.rel (0) target = $region45
    $region44: #{tpu_custom_call.1} parent=1 // pred_region
      _
    $region45: #{tpu_custom_call.1} parent=1 // pred_fallthru
      _
    // Predicated region
    $region46: #{tpu_custom_call.1} parent=1 // pred_check
      _
    $region47: #{tpu_custom_call.1} parent=1 // pred_check_branch
      %57 = sbr.rel (0) target = $region49
    $region48: #{tpu_custom_call.1} parent=1 // pred_region
      _
    $region49: #{tpu_custom_call.1} parent=1 // pred_fallthru
      _
    // Predicated region
    $region50: #{tpu_custom_call.1} parent=1 // pred_check
      _
    $region51: #{tpu_custom_call.1} parent=1 // pred_check_branch
      %59 = sbr.rel (0) target = $region53
    $region52: #{tpu_custom_call.1} parent=1 // pred_region
      _
    $region53: #{tpu_custom_call.1} parent=1 // pred_fallthru
      _
    // Predicated region
    $region54: #{tpu_custom_call.1} parent=1 // pred_check
      _
    $region55: #{tpu_custom_call.1} parent=1 // pred_check_branch
      %61 = sbr.rel (0) target = $region57
    $region56: #{tpu_custom_call.1} parent=1 // pred_region
      _
    $region57: #{tpu_custom_call.1} parent=1 // pred_fallthru
      _
    // Predicated region
    $region58: #{tpu_custom_call.1} parent=1 // pred_check
      _
    $region59: #{tpu_custom_call.1} parent=1 // pred_check_branch
      %63 = sbr.rel (0) target = $region61
    $region60: #{tpu_custom_call.1} parent=1 // pred_region
      _
    $region61: #{tpu_custom_call.1} parent=1 // pred_fallthru
      _
    // Predicated region
    $region62: #{tpu_custom_call.1} parent=1 // pred_check
      _
    $region63: #{tpu_custom_call.1} parent=1 // pred_check_branch
      %65 = sbr.rel (0) target = $region65
    $region64: #{tpu_custom_call.1} parent=1 // pred_region
      _
    $region65: #{tpu_custom_call.1} parent=1 // pred_fallthru
      _
    // Predicated region
    $region66: #{tpu_custom_call.1} parent=1 // pred_check
      _
    $region67: #{tpu_custom_call.1} parent=1 // pred_check_branch
      %67 = sbr.rel (0) target = $region69
    $region68: #{tpu_custom_call.1} parent=1 // pred_region
      _
    $region69: #{tpu_custom_call.1} parent=1 // pred_fallthru
      _
    // Predicated region
    $region70: #{tpu_custom_call.1} parent=1 // pred_check
      _
    $region71: #{tpu_custom_call.1} parent=1 // pred_check_branch
      %69 = sbr.rel (0) target = $region73
    $region72: #{tpu_custom_call.1} parent=1 // pred_region
      _
    $region73: #{tpu_custom_call.1} parent=1 // pred_fallthru
      _
    // Predicated region
    $region74: #{tpu_custom_call.1} parent=1 // pred_check
      _
    $region75: #{tpu_custom_call.1} parent=1 // pred_check_branch
      %71 = sbr.rel (0) target = $region77
    $region76: #{tpu_custom_call.1} parent=1 // pred_region
      _
    $region77: #{tpu_custom_call.1} parent=1 // pred_fallthru
      _
    // Predicated region
    $region78: #{tpu_custom_call.1} parent=1 // pred_check
      _
    $region79: #{tpu_custom_call.1} parent=1 // pred_check_branch
      %73 = sbr.rel (0) target = $region81
    $region80: #{tpu_custom_call.1} parent=1 // pred_region
      %74 = dma.done [#allocation3], 64
    $region81: #{tpu_custom_call.1} parent=1 // pred_fallthru
      _
    %v75 = vld [vmem:[#allocation2] sm:$0xf]
    %v76 = vld [vmem:[%s1] sm:$0xff]
    %s77 = scalar_lea.vmem %s1, 8
    %v78 = vld [vmem:[%s77] sm:$0xff]
    %v81 = vunpack.c.l.s4 1983009808
    %v82 = vunpack.c.0.s8 %v81
    %v83 = vlaneseq
    %v84 = vshrl.u32 %v83, 7
    %v85 = vsub.s32 %v82, %v84
    %v86 = vrot.slane %v75, %v85
    %v87 = vcombine.high %v86, %v86
    %88 = vrot.lane.b32.xlu0 %v86, 127
    %v89 = vpop.permute.xlu0 %88
    %90 = vrot.lane.b32.xlu0 %v87, 127
    %v91 = vpop.permute.xlu0 %90
    %vm92 = vcmask 1039360
    %v93 = vsel %vm92, %v89, %v91
    %vm94 = vcmask 15360
    %v96 = vsel %vm94, %v78, 0
    %vm98 = vcmask 1041408
    %v99 = vsel %vm98, %v93, 0
    %v101 = vsel %vm98, %v91, 0
    %103 = vmatprep.subr.mxu0 %v101
    %104 = vmatpush1.msra.mxu0 %v99
    %105 = vmatprep.subr.mxu0 0.0
    %106 = vmatpush1.msra.mxu0 0.0
    %107 = vmatprep.subr.mxu0 0.0
    %108 = vmatpush1.msra.mxu0 0.0
    %109 = vmatprep.subr.mxu0 0.0
    %110 = vmatpush1.msra.mxu0 0.0
    %111 = vmatprep.subr.mxu0 0.0
    %112 = vmatpush1.msra.mxu0 0.0
    %113 = vmatprep.subr.mxu0 0.0
    %114 = vmatpush1.msra.mxu0 0.0
    %115 = vmatprep.subr.mxu0 0.0
    %116 = vmatpush1.msra.mxu0 0.0
    %117 = vmatprep.subr.mxu0 0.0
    %118 = vmatpush1.msra.mxu0 0.0
    %119 = vmatprep.subr.mxu0 0.0
    %120 = vmatpush1.msra.mxu0 0.0
    %121 = vmatprep.subr.mxu0 0.0
    %122 = vmatpush1.msra.mxu0 0.0
    %123 = vmatprep.subr.mxu0 0.0
    %124 = vmatpush1.msra.mxu0 0.0
    %125 = vmatprep.subr.mxu0 0.0
    %126 = vmatpush1.msra.mxu0 0.0
    %127 = vmatprep.subr.mxu0 0.0
    %128 = vmatpush1.msra.mxu0 0.0
    %129 = vmatprep.subr.mxu0 0.0
    %130 = vmatpush1.msra.mxu0 0.0
    %131 = vmatprep.subr.mxu0 0.0
    %132 = vmatpush1.msra.mxu0 0.0
    %133 = vmatprep.subr.mxu0 0.0
    %134 = vmatpush1.msra.mxu0 0.0
    %135 = vmatprep.subr.mxu0 0.0
    %136 = vmatpush1.msra.mxu0 0.0
    %137 = vmatprep.subr.mxu0 0.0
    %138 = vmatpush1.msra.mxu0 0.0
    %139 = vmatprep.subr.mxu0 0.0
    %140 = vmatpush1.msra.mxu0 0.0
    %141 = vmatprep.subr.mxu0 0.0
    %142 = vmatpush1.msra.mxu0 0.0
    %143 = vmatprep.subr.mxu0 0.0
    %144 = vmatpush1.msra.mxu0 0.0
    %145 = vmatprep.subr.mxu0 0.0
    %146 = vmatpush1.msra.mxu0 0.0
    %147 = vmatprep.subr.mxu0 0.0
    %148 = vmatpush1.msra.mxu0 0.0
    %149 = vmatprep.subr.mxu0 0.0
    %150 = vmatpush1.msra.mxu0 0.0
    %151 = vmatprep.subr.mxu0 0.0
    %152 = vmatpush1.msra.mxu0 0.0
    %153 = vmatprep.subr.mxu0 0.0
    %154 = vmatpush1.msra.mxu0 0.0
    %155 = vmatprep.subr.mxu0 0.0
    %156 = vmatpush1.msra.mxu0 0.0
    %157 = vmatprep.subr.mxu0 0.0
    %158 = vmatpush1.msra.mxu0 0.0
    %159 = vmatprep.subr.mxu0 0.0
    %160 = vmatpush1.msra.mxu0 0.0
    %161 = vmatprep.subr.mxu0 0.0
    %162 = vmatpush1.msra.mxu0 0.0
    %163 = vmatprep.subr.mxu0 0.0
    %164 = vmatpush1.msra.mxu0 0.0
    %165 = vmatprep.subr.mxu0 0.0
    %166 = vmatpush1.msra.mxu0 0.0
    %167 = vmatprep.mubr.f32.mxu0 0.0
    %168 = vmatmul.mubr.f32.gmra.mrb[0].mxu0 %v96
    %v169 = vpop.f32.mrb[0].mxu0
    %v170 = vadd.f32 0.0, %v169
    %v171 = vpop.f32.mrb[0].mxu0
    %v172 = vadd.f32 0.0, %v171
    %173 = vdwg.mxu0
    %v175 = vsel %vm94, %v76, 0
    %v177 = vsel %vm98, %v86, 0
    %v179 = vsel %vm98, %v87, 0
    %181 = vmatprep.subr.mxu0 %v179
    %182 = vmatpush1.msra.mxu0 %v177
    %183 = vmatprep.subr.mxu0 0.0
    %184 = vmatpush1.msra.mxu0 0.0
    %185 = vmatprep.subr.mxu0 0.0
    %186 = vmatpush1.msra.mxu0 0.0
    %187 = vmatprep.subr.mxu0 0.0
    %188 = vmatpush1.msra.mxu0 0.0
    %189 = vmatprep.subr.mxu0 0.0
    %190 = vmatpush1.msra.mxu0 0.0
    %191 = vmatprep.subr.mxu0 0.0
    %192 = vmatpush1.msra.mxu0 0.0
    %193 = vmatprep.subr.mxu0 0.0
    %194 = vmatpush1.msra.mxu0 0.0
    %195 = vmatprep.subr.mxu0 0.0
    %196 = vmatpush1.msra.mxu0 0.0
    %197 = vmatprep.subr.mxu0 0.0
    %198 = vmatpush1.msra.mxu0 0.0
    %199 = vmatprep.subr.mxu0 0.0
    %200 = vmatpush1.msra.mxu0 0.0
    %201 = vmatprep.subr.mxu0 0.0
    %202 = vmatpush1.msra.mxu0 0.0
    %203 = vmatprep.subr.mxu0 0.0
    %204 = vmatpush1.msra.mxu0 0.0
    %205 = vmatprep.subr.mxu0 0.0
    %206 = vmatpush1.msra.mxu0 0.0
    %207 = vmatprep.subr.mxu0 0.0
    %208 = vmatpush1.msra.mxu0 0.0
    %209 = vmatprep.subr.mxu0 0.0
    %210 = vmatpush1.msra.mxu0 0.0
    %211 = vmatprep.subr.mxu0 0.0
    %212 = vmatpush1.msra.mxu0 0.0
    %213 = vmatprep.subr.mxu0 0.0
    %214 = vmatpush1.msra.mxu0 0.0
    %215 = vmatprep.subr.mxu0 0.0
    %216 = vmatpush1.msra.mxu0 0.0
    %217 = vmatprep.subr.mxu0 0.0
    %218 = vmatpush1.msra.mxu0 0.0
    %219 = vmatprep.subr.mxu0 0.0
    %220 = vmatpush1.msra.mxu0 0.0
    %221 = vmatprep.subr.mxu0 0.0
    %222 = vmatpush1.msra.mxu0 0.0
    %223 = vmatprep.subr.mxu0 0.0
    %224 = vmatpush1.msra.mxu0 0.0
    %225 = vmatprep.subr.mxu0 0.0
    %226 = vmatpush1.msra.mxu0 0.0
    %227 = vmatprep.subr.mxu0 0.0
    %228 = vmatpush1.msra.mxu0 0.0
    %229 = vmatprep.subr.mxu0 0.0
    %230 = vmatpush1.msra.mxu0 0.0
    %231 = vmatprep.subr.mxu0 0.0
    %232 = vmatpush1.msra.mxu0 0.0
    %233 = vmatprep.subr.mxu0 0.0
    %234 = vmatpush1.msra.mxu0 0.0
    %235 = vmatprep.subr.mxu0 0.0
    %236 = vmatpush1.msra.mxu0 0.0
    %237 = vmatprep.subr.mxu0 0.0
    %238 = vmatpush1.msra.mxu0 0.0
    %239 = vmatprep.subr.mxu0 0.0
    %240 = vmatpush1.msra.mxu0 0.0
    %241 = vmatprep.subr.mxu0 0.0
    %242 = vmatpush1.msra.mxu0 0.0
    %243 = vmatprep.subr.mxu0 0.0
    %244 = vmatpush1.msra.mxu0 0.0
    %245 = vmatprep.mubr.f32.mxu0 0.0
    %246 = vmatmul.mubr.f32.gmra.mrb[0].mxu0 %v175
    %v247 = vpop.f32.mrb[0].mxu0
    %v248 = vadd.f32 %v170, %v247
    %v249 = vpop.f32.mrb[0].mxu0
    %v250 = vadd.f32 %v172, %v249
    %251 = vdwg.mxu0
    %s252 = scalar_lea.vmem %s1, 16
    %v253 = vld [vmem:[%s252] sm:$0xff]
    %254 = vrot.lane.b32.xlu0 %v86, 126
    %v255 = vpop.permute.xlu0 %254
    %256 = vrot.lane.b32.xlu0 %v87, 126
    %v257 = vpop.permute.xlu0 %256
    %vm258 = vcmask 1031168
    %v259 = vsel %vm258, %v255, %v257
    %v261 = vsel %vm94, %v253, 0
    %v263 = vsel %vm98, %v259, 0
    %v265 = vsel %vm98, %v257, 0
    %267 = vmatprep.subr.mxu0 %v265
    %268 = vmatpush1.msra.mxu0 %v263
    %269 = vmatprep.subr.mxu0 0.0
    %270 = vmatpush1.msra.mxu0 0.0
    %271 = vmatprep.subr.mxu0 0.0
    %272 = vmatpush1.msra.mxu0 0.0
    %273 = vmatprep.subr.mxu0 0.0
    %274 = vmatpush1.msra.mxu0 0.0
    %275 = vmatprep.subr.mxu0 0.0
    %276 = vmatpush1.msra.mxu0 0.0
    %277 = vmatprep.subr.mxu0 0.0
    %278 = vmatpush1.msra.mxu0 0.0
    %279 = vmatprep.subr.mxu0 0.0
    %280 = vmatpush1.msra.mxu0 0.0
    %281 = vmatprep.subr.mxu0 0.0
    %282 = vmatpush1.msra.mxu0 0.0
    %283 = vmatprep.subr.mxu0 0.0
    %284 = vmatpush1.msra.mxu0 0.0
    %285 = vmatprep.subr.mxu0 0.0
    %286 = vmatpush1.msra.mxu0 0.0
    %287 = vmatprep.subr.mxu0 0.0
    %288 = vmatpush1.msra.mxu0 0.0
    %289 = vmatprep.subr.mxu0 0.0
    %290 = vmatpush1.msra.mxu0 0.0
    %291 = vmatprep.subr.mxu0 0.0
    %292 = vmatpush1.msra.mxu0 0.0
    %293 = vmatprep.subr.mxu0 0.0
    %294 = vmatpush1.msra.mxu0 0.0
    %295 = vmatprep.subr.mxu0 0.0
    %296 = vmatpush1.msra.mxu0 0.0
    %297 = vmatprep.subr.mxu0 0.0
    %298 = vmatpush1.msra.mxu0 0.0
    %299 = vmatprep.subr.mxu0 0.0
    %300 = vmatpush1.msra.mxu0 0.0
    %301 = vmatprep.subr.mxu0 0.0
    %302 = vmatpush1.msra.mxu0 0.0
    %303 = vmatprep.subr.mxu0 0.0
    %304 = vmatpush1.msra.mxu0 0.0
    %305 = vmatprep.subr.mxu0 0.0
    %306 = vmatpush1.msra.mxu0 0.0
    %307 = vmatprep.subr.mxu0 0.0
    %308 = vmatpush1.msra.mxu0 0.0
    %309 = vmatprep.subr.mxu0 0.0
    %310 = vmatpush1.msra.mxu0 0.0
    %311 = vmatprep.subr.mxu0 0.0
    %312 = vmatpush1.msra.mxu0 0.0
    %313 = vmatprep.subr.mxu0 0.0
    %314 = vmatpush1.msra.mxu0 0.0
    %315 = vmatprep.subr.mxu0 0.0
    %316 = vmatpush1.msra.mxu0 0.0
    %317 = vmatprep.subr.mxu0 0.0
    %318 = vmatpush1.msra.mxu0 0.0
    %319 = vmatprep.subr.mxu0 0.0
    %320 = vmatpush1.msra.mxu0 0.0
    %321 = vmatprep.subr.mxu0 0.0
    %322 = vmatpush1.msra.mxu0 0.0
    %323 = vmatprep.subr.mxu0 0.0
    %324 = vmatpush1.msra.mxu0 0.0
    %325 = vmatprep.subr.mxu0 0.0
    %326 = vmatpush1.msra.mxu0 0.0
    %327 = vmatprep.subr.mxu0 0.0
    %328 = vmatpush1.msra.mxu0 0.0
    %329 = vmatprep.subr.mxu0 0.0
    %330 = vmatpush1.msra.mxu0 0.0
    %331 = vmatprep.mubr.f32.mxu0 0.0
    %332 = vmatmul.mubr.f32.gmra.mrb[0].mxu0 %v261
    %v333 = vpop.f32.mrb[0].mxu0
    %v334 = vadd.f32 0.0, %v333
    %v335 = vpop.f32.mrb[0].mxu0
    %v336 = vadd.f32 0.0, %v335
    %337 = vdwg.mxu0
    %v338 = vadd.f32 %v248, %v334
    %v339 = vadd.f32 %v250, %v336
    %v340 = vld [vmem:[%s2] sm:$0xff]
    %342 = vset.pattern.permute.xlu0 0
    %343 = vperm.xlu0 %342, %v340
    %v344 = vpop.permute.xlu0 %343
    %v346 = vadd.f32 %v338, %v344
    %v347 = vadd.f32 %v339, %v344
    %350 = vrot.lane.b32.xlu0 %v346, 127
    %v351 = vpop.permute.xlu0 %350
    %352 = vrot.lane.b32.xlu0 %v347, 127
    %v353 = vpop.permute.xlu0 %352
    %v354 = vsel %vm92, %v351, %v353
    %v357 = vmax.f32 %v346, %v354
    %v358 = vmax.f32 %v347, %v353
    %359 = vrot.lane.b32.xlu0 %v346, 126
    %v360 = vpop.permute.xlu0 %359
    %361 = vrot.lane.b32.xlu0 %v347, 126
    %v362 = vpop.permute.xlu0 %361
    %v363 = vsel %vm258, %v360, %v362
    %v366 = vmax.f32 %v357, %v363
    %v367 = vmax.f32 %v358, %v362
    %v368 = vld [vmem:[%s3] sm:$0xff]
    %v369 = vld [vmem:[%s3 + $0x8] sm:$0xff]
    %v370 = vld [vmem:[%s3 + $0x10] sm:$0xff]
    %v371 = vld [vmem:[%s3 + $0x18] sm:$0xff]
    %v372 = vld [vmem:[%s3 + $0x20] sm:$0xff]
    %v373 = vld [vmem:[%s3 + $0x28] sm:$0xff]
    %v374 = vld [vmem:[%s3 + $0x30] sm:$0xff]
    %v375 = vld [vmem:[%s3 + $0x38] sm:$0xff]
    %v376 = vld [vmem:[%s3 + $0x40] sm:$0xff]
    %v377 = vld [vmem:[%s3 + $0x48] sm:$0xff]
    %v378 = vld [vmem:[%s3 + $0x50] sm:$0xff]
    %v379 = vld [vmem:[%s3 + $0x58] sm:$0xff]
    %v380 = vld [vmem:[%s3 + $0x60] sm:$0xff]
    %v381 = vld [vmem:[%s3 + $0x68] sm:$0xff]
    %v382 = vld [vmem:[%s3 + $0x70] sm:$0xff]
    %v383 = vld [vmem:[%s3 + $0x78] sm:$0xff]
    %v384 = vld [vmem:[%s3 + $0x80] sm:$0xff]
    %v385 = vld [vmem:[%s3 + $0x88] sm:$0xff]
    %v386 = vld [vmem:[%s3 + $0x90] sm:$0xff]
    %v387 = vld [vmem:[%s3 + $0x98] sm:$0xff]
    %v388 = vld [vmem:[%s3 + $0xa0] sm:$0xff]
    %v389 = vld [vmem:[%s3 + $0xa8] sm:$0xff]
    %v390 = vld [vmem:[%s3 + $0xb0] sm:$0xff]
    %v391 = vld [vmem:[%s3 + $0xb8] sm:$0xff]
    %v392 = vld [vmem:[%s3 + $0xc0] sm:$0xff]
    %v393 = vld [vmem:[%s3 + $0xc8] sm:$0xff]
    %v394 = vld [vmem:[%s3 + $0xd0] sm:$0xff]
    %v395 = vld [vmem:[%s3 + $0xd8] sm:$0xff]
    %v396 = vld [vmem:[%s3 + $0xe0] sm:$0xff]
    %v397 = vld [vmem:[%s3 + $0xe8] sm:$0xff]
    %v398 = vld [vmem:[%s3 + $0xf0] sm:$0xff]
    %v399 = vld [vmem:[%s3 + $0xf8] sm:$0xf]
    %vm400 = vcmask 1014784
    %v402 = vsel %vm400, %v367, 0
    %vm404 = vcmask 1043456
    %v406 = vsel %vm404, %v399, 0
    %408 = vmatprep.subr.mxu0 0.0
    %409 = vmatpush1.msra.mxu0 %v368
    %410 = vmatprep.subr.mxu0 0.0
    %411 = vmatpush1.msra.mxu0 %v369
    %412 = vmatprep.subr.mxu0 0.0
    %413 = vmatpush1.msra.mxu0 %v370
    %414 = vmatprep.subr.mxu0 0.0
    %415 = vmatpush1.msra.mxu0 %v371
    %416 = vmatprep.subr.mxu0 0.0
    %417 = vmatpush1.msra.mxu0 %v372
    %418 = vmatprep.subr.mxu0 0.0
    %419 = vmatpush1.msra.mxu0 %v373
    %420 = vmatprep.subr.mxu0 0.0
    %421 = vmatpush1.msra.mxu0 %v374
    %422 = vmatprep.subr.mxu0 0.0
    %423 = vmatpush1.msra.mxu0 %v375
    %424 = vmatprep.subr.mxu0 0.0
    %425 = vmatpush1.msra.mxu0 %v376
    %426 = vmatprep.subr.mxu0 0.0
    %427 = vmatpush1.msra.mxu0 %v377
    %428 = vmatprep.subr.mxu0 0.0
    %429 = vmatpush1.msra.mxu0 %v378
    %430 = vmatprep.subr.mxu0 0.0
    %431 = vmatpush1.msra.mxu0 %v379
    %432 = vmatprep.subr.mxu0 0.0
    %433 = vmatpush1.msra.mxu0 %v380
    %434 = vmatprep.subr.mxu0 0.0
    %435 = vmatpush1.msra.mxu0 %v381
    %436 = vmatprep.subr.mxu0 0.0
    %437 = vmatpush1.msra.mxu0 %v382
    %438 = vmatprep.subr.mxu0 0.0
    %439 = vmatpush1.msra.mxu0 %v383
    %440 = vmatprep.subr.mxu0 0.0
    %441 = vmatpush1.msra.mxu0 %v384
    %442 = vmatprep.subr.mxu0 0.0
    %443 = vmatpush1.msra.mxu0 %v385
    %444 = vmatprep.subr.mxu0 0.0
    %445 = vmatpush1.msra.mxu0 %v386
    %446 = vmatprep.subr.mxu0 0.0
    %447 = vmatpush1.msra.mxu0 %v387
    %448 = vmatprep.subr.mxu0 0.0
    %449 = vmatpush1.msra.mxu0 %v388
    %450 = vmatprep.subr.mxu0 0.0
    %451 = vmatpush1.msra.mxu0 %v389
    %452 = vmatprep.subr.mxu0 0.0
    %453 = vmatpush1.msra.mxu0 %v390
    %454 = vmatprep.subr.mxu0 0.0
    %455 = vmatpush1.msra.mxu0 %v391
    %456 = vmatprep.subr.mxu0 0.0
    %457 = vmatpush1.msra.mxu0 %v392
    %458 = vmatprep.subr.mxu0 0.0
    %459 = vmatpush1.msra.mxu0 %v393
    %460 = vmatprep.subr.mxu0 0.0
    %461 = vmatpush1.msra.mxu0 %v394
    %462 = vmatprep.subr.mxu0 0.0
    %463 = vmatpush1.msra.mxu0 %v395
    %464 = vmatprep.subr.mxu0 0.0
    %465 = vmatpush1.msra.mxu0 %v396
    %466 = vmatprep.subr.mxu0 0.0
    %467 = vmatpush1.msra.mxu0 %v397
    %468 = vmatprep.subr.mxu0 0.0
    %469 = vmatpush1.msra.mxu0 %v398
    %470 = vmatprep.subr.mxu0 0.0
    %471 = vmatpush1.msra.mxu0 %v406
    %472 = vmatprep.mubr.f32.mxu0 %v402
    %473 = vmatmul.mubr.f32.gmra.mrb[0].mxu0 %v366
    %v474 = vpop.f32.mrb[0].mxu0
    %v475 = vadd.f32 0.0, %v474
    %v476 = vpop.f32.mrb[0].mxu0
    %477 = vdwg.mxu0
    %vm478 = vcmp.ge.f32.partialorder %v475, 0.0
    %v479 = vmul.f32 %v475, 0.01
    %v480 = vsel %vm478, %v475, %v479
    %v481 = vld [vmem:[%s4] sm:$0xff]
    %s482 = scalar_lea.vmem %s4, 8
    %v483 = vld [vmem:[%s482] sm:$0xff]
    %485 = vrot.lane.b32.xlu0 %v480, 127
    %v486 = vpop.permute.xlu0 %485
    %vm488 = vcmask 64512
    %v490 = vsel %vm488, %v483, 0
    %492 = vmatprep.subr.mxu0 0.0
    %493 = vmatpush1.msra.mxu0 %v486
    %494 = vmatprep.subr.mxu0 0.0
    %495 = vmatpush1.msra.mxu0 0.0
    %496 = vmatprep.subr.mxu0 0.0
    %497 = vmatpush1.msra.mxu0 0.0
    %498 = vmatprep.subr.mxu0 0.0
    %499 = vmatpush1.msra.mxu0 0.0
    %500 = vmatprep.subr.mxu0 0.0
    %501 = vmatpush1.msra.mxu0 0.0
    %502 = vmatprep.subr.mxu0 0.0
    %503 = vmatpush1.msra.mxu0 0.0
    %504 = vmatprep.subr.mxu0 0.0
    %505 = vmatpush1.msra.mxu0 0.0
    %506 = vmatprep.subr.mxu0 0.0
    %507 = vmatpush1.msra.mxu0 0.0
    %508 = vmatprep.subr.mxu0 0.0
    %509 = vmatpush1.msra.mxu0 0.0
    %510 = vmatprep.subr.mxu0 0.0
    %511 = vmatpush1.msra.mxu0 0.0
    %512 = vmatprep.subr.mxu0 0.0
    %513 = vmatpush1.msra.mxu0 0.0
    %514 = vmatprep.subr.mxu0 0.0
    %515 = vmatpush1.msra.mxu0 0.0
    %516 = vmatprep.subr.mxu0 0.0
    %517 = vmatpush1.msra.mxu0 0.0
    %518 = vmatprep.subr.mxu0 0.0
    %519 = vmatpush1.msra.mxu0 0.0
    %520 = vmatprep.subr.mxu0 0.0
    %521 = vmatpush1.msra.mxu0 0.0
    %522 = vmatprep.subr.mxu0 0.0
    %523 = vmatpush1.msra.mxu0 0.0
    %524 = vmatprep.subr.mxu0 0.0
    %525 = vmatpush1.msra.mxu0 0.0
    %526 = vmatprep.subr.mxu0 0.0
    %527 = vmatpush1.msra.mxu0 0.0
    %528 = vmatprep.subr.mxu0 0.0
    %529 = vmatpush1.msra.mxu0 0.0
    %530 = vmatprep.subr.mxu0 0.0
    %531 = vmatpush1.msra.mxu0 0.0
    %532 = vmatprep.subr.mxu0 0.0
    %533 = vmatpush1.msra.mxu0 0.0
    %534 = vmatprep.subr.mxu0 0.0
    %535 = vmatpush1.msra.mxu0 0.0
    %536 = vmatprep.subr.mxu0 0.0
    %537 = vmatpush1.msra.mxu0 0.0
    %538 = vmatprep.subr.mxu0 0.0
    %539 = vmatpush1.msra.mxu0 0.0
    %540 = vmatprep.subr.mxu0 0.0
    %541 = vmatpush1.msra.mxu0 0.0
    %542 = vmatprep.subr.mxu0 0.0
    %543 = vmatpush1.msra.mxu0 0.0
    %544 = vmatprep.subr.mxu0 0.0
    %545 = vmatpush1.msra.mxu0 0.0
    %546 = vmatprep.subr.mxu0 0.0
    %547 = vmatpush1.msra.mxu0 0.0
    %548 = vmatprep.subr.mxu0 0.0
    %549 = vmatpush1.msra.mxu0 0.0
    %550 = vmatprep.subr.mxu0 0.0
    %551 = vmatpush1.msra.mxu0 0.0
    %552 = vmatprep.subr.mxu0 0.0
    %553 = vmatpush1.msra.mxu0 0.0
    %554 = vmatprep.subr.mxu0 0.0
    %555 = vmatpush1.msra.mxu0 0.0
    %556 = vmatprep.mubr.f32.mxu0 0.0
    %557 = vmatmul.mubr.f32.gmra.mrb[0].mxu0 %v490
    %v558 = vpop.f32.mrb[0].mxu0
    %v559 = vadd.f32 0.0, %v558
    %v560 = vpop.f32.mrb[0].mxu0
    %561 = vdwg.mxu0
    %v563 = vsel %vm488, %v481, 0
    %565 = vmatprep.subr.mxu0 0.0
    %566 = vmatpush1.msra.mxu0 %v480
    %567 = vmatprep.subr.mxu0 0.0
    %568 = vmatpush1.msra.mxu0 0.0
    %569 = vmatprep.subr.mxu0 0.0
    %570 = vmatpush1.msra.mxu0 0.0
    %571 = vmatprep.subr.mxu0 0.0
    %572 = vmatpush1.msra.mxu0 0.0
    %573 = vmatprep.subr.mxu0 0.0
    %574 = vmatpush1.msra.mxu0 0.0
    %575 = vmatprep.subr.mxu0 0.0
    %576 = vmatpush1.msra.mxu0 0.0
    %577 = vmatprep.subr.mxu0 0.0
    %578 = vmatpush1.msra.mxu0 0.0
    %579 = vmatprep.subr.mxu0 0.0
    %580 = vmatpush1.msra.mxu0 0.0
    %581 = vmatprep.subr.mxu0 0.0
    %582 = vmatpush1.msra.mxu0 0.0
    %583 = vmatprep.subr.mxu0 0.0
    %584 = vmatpush1.msra.mxu0 0.0
    %585 = vmatprep.subr.mxu0 0.0
    %586 = vmatpush1.msra.mxu0 0.0
    %587 = vmatprep.subr.mxu0 0.0
    %588 = vmatpush1.msra.mxu0 0.0
    %589 = vmatprep.subr.mxu0 0.0
    %590 = vmatpush1.msra.mxu0 0.0
    %591 = vmatprep.subr.mxu0 0.0
    %592 = vmatpush1.msra.mxu0 0.0
    %593 = vmatprep.subr.mxu0 0.0
    %594 = vmatpush1.msra.mxu0 0.0
    %595 = vmatprep.subr.mxu0 0.0
    %596 = vmatpush1.msra.mxu0 0.0
    %597 = vmatprep.subr.mxu0 0.0
    %598 = vmatpush1.msra.mxu0 0.0
    %599 = vmatprep.subr.mxu0 0.0
    %600 = vmatpush1.msra.mxu0 0.0
    %601 = vmatprep.subr.mxu0 0.0
    %602 = vmatpush1.msra.mxu0 0.0
    %603 = vmatprep.subr.mxu0 0.0
    %604 = vmatpush1.msra.mxu0 0.0
    %605 = vmatprep.subr.mxu0 0.0
    %606 = vmatpush1.msra.mxu0 0.0
    %607 = vmatprep.subr.mxu0 0.0
    %608 = vmatpush1.msra.mxu0 0.0
    %609 = vmatprep.subr.mxu0 0.0
    %610 = vmatpush1.msra.mxu0 0.0
    %611 = vmatprep.subr.mxu0 0.0
    %612 = vmatpush1.msra.mxu0 0.0
    %613 = vmatprep.subr.mxu0 0.0
    %614 = vmatpush1.msra.mxu0 0.0
    %615 = vmatprep.subr.mxu0 0.0
    %616 = vmatpush1.msra.mxu0 0.0
    %617 = vmatprep.subr.mxu0 0.0
    %618 = vmatpush1.msra.mxu0 0.0
    %619 = vmatprep.subr.mxu0 0.0
    %620 = vmatpush1.msra.mxu0 0.0
    %621 = vmatprep.subr.mxu0 0.0
    %622 = vmatpush1.msra.mxu0 0.0
    %623 = vmatprep.subr.mxu0 0.0
    %624 = vmatpush1.msra.mxu0 0.0
    %625 = vmatprep.subr.mxu0 0.0
    %626 = vmatpush1.msra.mxu0 0.0
    %627 = vmatprep.subr.mxu0 0.0
    %628 = vmatpush1.msra.mxu0 0.0
    %629 = vmatprep.mubr.f32.mxu0 0.0
    %630 = vmatmul.mubr.f32.gmra.mrb[0].mxu0 %v563
    %v631 = vpop.f32.mrb[0].mxu0
    %v632 = vadd.f32 %v559, %v631
    %v633 = vpop.f32.mrb[0].mxu0
    %634 = vdwg.mxu0
    %s635 = scalar_lea.vmem %s4, 16
    %v636 = vld [vmem:[%s635] sm:$0xff]
    %637 = vrot.lane.b32.xlu0 %v480, 126
    %v638 = vpop.permute.xlu0 %637
    %v641 = vsel %vm488, %v636, 0
    %643 = vmatprep.subr.mxu0 0.0
    %644 = vmatpush1.msra.mxu0 %v638
    %645 = vmatprep.subr.mxu0 0.0
    %646 = vmatpush1.msra.mxu0 0.0
    %647 = vmatprep.subr.mxu0 0.0
    %648 = vmatpush1.msra.mxu0 0.0
    %649 = vmatprep.subr.mxu0 0.0
    %650 = vmatpush1.msra.mxu0 0.0
    %651 = vmatprep.subr.mxu0 0.0
    %652 = vmatpush1.msra.mxu0 0.0
    %653 = vmatprep.subr.mxu0 0.0
    %654 = vmatpush1.msra.mxu0 0.0
    %655 = vmatprep.subr.mxu0 0.0
    %656 = vmatpush1.msra.mxu0 0.0
    %657 = vmatprep.subr.mxu0 0.0
    %658 = vmatpush1.msra.mxu0 0.0
    %659 = vmatprep.subr.mxu0 0.0
    %660 = vmatpush1.msra.mxu0 0.0
    %661 = vmatprep.subr.mxu0 0.0
    %662 = vmatpush1.msra.mxu0 0.0
    %663 = vmatprep.subr.mxu0 0.0
    %664 = vmatpush1.msra.mxu0 0.0
    %665 = vmatprep.subr.mxu0 0.0
    %666 = vmatpush1.msra.mxu0 0.0
    %667 = vmatprep.subr.mxu0 0.0
    %668 = vmatpush1.msra.mxu0 0.0
    %669 = vmatprep.subr.mxu0 0.0
    %670 = vmatpush1.msra.mxu0 0.0
    %671 = vmatprep.subr.mxu0 0.0
    %672 = vmatpush1.msra.mxu0 0.0
    %673 = vmatprep.subr.mxu0 0.0
    %674 = vmatpush1.msra.mxu0 0.0
    %675 = vmatprep.subr.mxu0 0.0
    %676 = vmatpush1.msra.mxu0 0.0
    %677 = vmatprep.subr.mxu0 0.0
    %678 = vmatpush1.msra.mxu0 0.0
    %679 = vmatprep.subr.mxu0 0.0
    %680 = vmatpush1.msra.mxu0 0.0
    %681 = vmatprep.subr.mxu0 0.0
    %682 = vmatpush1.msra.mxu0 0.0
    %683 = vmatprep.subr.mxu0 0.0
    %684 = vmatpush1.msra.mxu0 0.0
    %685 = vmatprep.subr.mxu0 0.0
    %686 = vmatpush1.msra.mxu0 0.0
    %687 = vmatprep.subr.mxu0 0.0
    %688 = vmatpush1.msra.mxu0 0.0
    %689 = vmatprep.subr.mxu0 0.0
    %690 = vmatpush1.msra.mxu0 0.0
    %691 = vmatprep.subr.mxu0 0.0
    %692 = vmatpush1.msra.mxu0 0.0
    %693 = vmatprep.subr.mxu0 0.0
    %694 = vmatpush1.msra.mxu0 0.0
    %695 = vmatprep.subr.mxu0 0.0
    %696 = vmatpush1.msra.mxu0 0.0
    %697 = vmatprep.subr.mxu0 0.0
    %698 = vmatpush1.msra.mxu0 0.0
    %699 = vmatprep.subr.mxu0 0.0
    %700 = vmatpush1.msra.mxu0 0.0
    %701 = vmatprep.subr.mxu0 0.0
    %702 = vmatpush1.msra.mxu0 0.0
    %703 = vmatprep.subr.mxu0 0.0
    %704 = vmatpush1.msra.mxu0 0.0
    %705 = vmatprep.subr.mxu0 0.0
    %706 = vmatpush1.msra.mxu0 0.0
    %707 = vmatprep.mubr.f32.mxu0 0.0
    %708 = vmatmul.mubr.f32.gmra.mrb[0].mxu0 %v641
    %v709 = vpop.f32.mrb[0].mxu0
    %v710 = vadd.f32 0.0, %v709
    %v711 = vpop.f32.mrb[0].mxu0
    %712 = vdwg.mxu0
    %v713 = vadd.f32 %v632, %v710
    %v714 = vld [vmem:[%s5] sm:$0xff]
    %716 = vset.pattern.permute.xlu0 0
    %717 = vperm.xlu0 %716, %v714
    %v718 = vpop.permute.xlu0 %717
    %v720 = vadd.f32 %v713, %v718
    %722 = vrot.lane.b32.xlu0 %v720, 127
    %v723 = vpop.permute.xlu0 %722
    %v725 = vmax.f32 %v720, %v723
    %726 = vrot.lane.b32.xlu0 %v720, 126
    %v727 = vpop.permute.xlu0 %726
    %v729 = vmax.f32 %v725, %v727
    %v730 = vld [vmem:[%s6] sm:$0xff]
    %v731 = vld [vmem:[%s6 + $0x8] sm:$0xff]
    %v732 = vld [vmem:[%s6 + $0x10] sm:$0xff]
    %v733 = vld [vmem:[%s6 + $0x18] sm:$0xff]
    %v734 = vld [vmem:[%s6 + $0x20] sm:$0xff]
    %v735 = vld [vmem:[%s6 + $0x28] sm:$0xff]
    %v736 = vld [vmem:[%s6 + $0x30] sm:$0xff]
    %v737 = vld [vmem:[%s6 + $0x38] sm:$0xff]
    %v738 = vld [vmem:[%s6 + $0x40] sm:$0xff]
    %v739 = vld [vmem:[%s6 + $0x48] sm:$0xff]
    %v740 = vld [vmem:[%s6 + $0x50] sm:$0xff]
    %v741 = vld [vmem:[%s6 + $0x58] sm:$0xff]
    %v742 = vld [vmem:[%s6 + $0x60] sm:$0xff]
    %v743 = vld [vmem:[%s6 + $0x68] sm:$0xff]
    %v744 = vld [vmem:[%s6 + $0x70] sm:$0xff]
    %v745 = vld [vmem:[%s6 + $0x78] sm:$0x3]
    %vm746 = vcmask 998400
    %v748 = vsel %vm746, %v729, 0
    %v751 = vsel %vm98, %v745, 0
    %753 = vmatprep.subr.mxu0 0.0
    %754 = vmatpush1.msra.mxu0 %v730
    %755 = vmatprep.subr.mxu0 0.0
    %756 = vmatpush1.msra.mxu0 %v731
    %757 = vmatprep.subr.mxu0 0.0
    %758 = vmatpush1.msra.mxu0 %v732
    %759 = vmatprep.subr.mxu0 0.0
    %760 = vmatpush1.msra.mxu0 %v733
    %761 = vmatprep.subr.mxu0 0.0
    %762 = vmatpush1.msra.mxu0 %v734
    %763 = vmatprep.subr.mxu0 0.0
    %764 = vmatpush1.msra.mxu0 %v735
    %765 = vmatprep.subr.mxu0 0.0
    %766 = vmatpush1.msra.mxu0 %v736
    %767 = vmatprep.subr.mxu0 0.0
    %768 = vmatpush1.msra.mxu0 %v737
    %769 = vmatprep.subr.mxu0 0.0
    %770 = vmatpush1.msra.mxu0 %v738
    %771 = vmatprep.subr.mxu0 0.0
    %772 = vmatpush1.msra.mxu0 %v739
    %773 = vmatprep.subr.mxu0 0.0
    %774 = vmatpush1.msra.mxu0 %v740
    %775 = vmatprep.subr.mxu0 0.0
    %776 = vmatpush1.msra.mxu0 %v741
    %777 = vmatprep.subr.mxu0 0.0
    %778 = vmatpush1.msra.mxu0 %v742
    %779 = vmatprep.subr.mxu0 0.0
    %780 = vmatpush1.msra.mxu0 %v743
    %781 = vmatprep.subr.mxu0 0.0
    %782 = vmatpush1.msra.mxu0 %v744
    %783 = vmatprep.subr.mxu0 0.0
    %784 = vmatpush1.msra.mxu0 %v751
    %785 = vmatprep.subr.mxu0 0.0
    %786 = vmatpush1.msra.mxu0 0.0
    %787 = vmatprep.subr.mxu0 0.0
    %788 = vmatpush1.msra.mxu0 0.0
    %789 = vmatprep.subr.mxu0 0.0
    %790 = vmatpush1.msra.mxu0 0.0
    %791 = vmatprep.subr.mxu0 0.0
    %792 = vmatpush1.msra.mxu0 0.0
    %793 = vmatprep.subr.mxu0 0.0
    %794 = vmatpush1.msra.mxu0 0.0
    %795 = vmatprep.subr.mxu0 0.0
    %796 = vmatpush1.msra.mxu0 0.0
    %797 = vmatprep.subr.mxu0 0.0
    %798 = vmatpush1.msra.mxu0 0.0
    %799 = vmatprep.subr.mxu0 0.0
    %800 = vmatpush1.msra.mxu0 0.0
    %801 = vmatprep.subr.mxu0 0.0
    %802 = vmatpush1.msra.mxu0 0.0
    %803 = vmatprep.subr.mxu0 0.0
    %804 = vmatpush1.msra.mxu0 0.0
    %805 = vmatprep.subr.mxu0 0.0
    %806 = vmatpush1.msra.mxu0 0.0
    %807 = vmatprep.subr.mxu0 0.0
    %808 = vmatpush1.msra.mxu0 0.0
    %809 = vmatprep.subr.mxu0 0.0
    %810 = vmatpush1.msra.mxu0 0.0
    %811 = vmatprep.subr.mxu0 0.0
    %812 = vmatpush1.msra.mxu0 0.0
    %813 = vmatprep.subr.mxu0 0.0
    %814 = vmatpush1.msra.mxu0 0.0
    %815 = vmatprep.subr.mxu0 0.0
    %816 = vmatpush1.msra.mxu0 0.0
    %817 = vmatprep.mubr.f32.mxu0 0.0
    %818 = vmatmul.mubr.f32.gmra.mrb[0].mxu0 %v748
    %v819 = vpop.f32.mrb[0].mxu0
    %v820 = vadd.f32 0.0, %v819
    %v821 = vpop.f32.mrb[0].mxu0
    %822 = vdwg.mxu0
    %vm823 = vcmp.ge.f32.partialorder %v820, 0.0
    %v824 = vmul.f32 %v820, 0.01
    %v825 = vsel %vm823, %v820, %v824
    %v826 = vld [vmem:[%s7] sm:$0xff]
    %s827 = scalar_lea.vmem %s7, 8
    %v828 = vld [vmem:[%s827] sm:$0xff]
    %830 = vrot.lane.b32.xlu0 %v825, 127
    %v831 = vpop.permute.xlu0 %830
    %v834 = vsel %vm488, %v828, 0
    %836 = vmatprep.subr.mxu0 0.0
    %837 = vmatpush1.msra.mxu0 %v831
    %838 = vmatprep.subr.mxu0 0.0
    %839 = vmatpush1.msra.mxu0 0.0
    %840 = vmatprep.subr.mxu0 0.0
    %841 = vmatpush1.msra.mxu0 0.0
    %842 = vmatprep.subr.mxu0 0.0
    %843 = vmatpush1.msra.mxu0 0.0
    %844 = vmatprep.subr.mxu0 0.0
    %845 = vmatpush1.msra.mxu0 0.0
    %846 = vmatprep.subr.mxu0 0.0
    %847 = vmatpush1.msra.mxu0 0.0
    %848 = vmatprep.subr.mxu0 0.0
    %849 = vmatpush1.msra.mxu0 0.0
    %850 = vmatprep.subr.mxu0 0.0
    %851 = vmatpush1.msra.mxu0 0.0
    %852 = vmatprep.subr.mxu0 0.0
    %853 = vmatpush1.msra.mxu0 0.0
    %854 = vmatprep.subr.mxu0 0.0
    %855 = vmatpush1.msra.mxu0 0.0
    %856 = vmatprep.subr.mxu0 0.0
    %857 = vmatpush1.msra.mxu0 0.0
    %858 = vmatprep.subr.mxu0 0.0
    %859 = vmatpush1.msra.mxu0 0.0
    %860 = vmatprep.subr.mxu0 0.0
    %861 = vmatpush1.msra.mxu0 0.0
    %862 = vmatprep.subr.mxu0 0.0
    %863 = vmatpush1.msra.mxu0 0.0
    %864 = vmatprep.subr.mxu0 0.0
    %865 = vmatpush1.msra.mxu0 0.0
    %866 = vmatprep.subr.mxu0 0.0
    %867 = vmatpush1.msra.mxu0 0.0
    %868 = vmatprep.subr.mxu0 0.0
    %869 = vmatpush1.msra.mxu0 0.0
    %870 = vmatprep.subr.mxu0 0.0
    %871 = vmatpush1.msra.mxu0 0.0
    %872 = vmatprep.subr.mxu0 0.0
    %873 = vmatpush1.msra.mxu0 0.0
    %874 = vmatprep.subr.mxu0 0.0
    %875 = vmatpush1.msra.mxu0 0.0
    %876 = vmatprep.subr.mxu0 0.0
    %877 = vmatpush1.msra.mxu0 0.0
    %878 = vmatprep.subr.mxu0 0.0
    %879 = vmatpush1.msra.mxu0 0.0
    %880 = vmatprep.subr.mxu0 0.0
    %881 = vmatpush1.msra.mxu0 0.0
    %882 = vmatprep.subr.mxu0 0.0
    %883 = vmatpush1.msra.mxu0 0.0
    %884 = vmatprep.subr.mxu0 0.0
    %885 = vmatpush1.msra.mxu0 0.0
    %886 = vmatprep.subr.mxu0 0.0
    %887 = vmatpush1.msra.mxu0 0.0
    %888 = vmatprep.subr.mxu0 0.0
    %889 = vmatpush1.msra.mxu0 0.0
    %890 = vmatprep.subr.mxu0 0.0
    %891 = vmatpush1.msra.mxu0 0.0
    %892 = vmatprep.subr.mxu0 0.0
    %893 = vmatpush1.msra.mxu0 0.0
    %894 = vmatprep.subr.mxu0 0.0
    %895 = vmatpush1.msra.mxu0 0.0
    %896 = vmatprep.subr.mxu0 0.0
    %897 = vmatpush1.msra.mxu0 0.0
    %898 = vmatprep.subr.mxu0 0.0
    %899 = vmatpush1.msra.mxu0 0.0
    %900 = vmatprep.mubr.f32.mxu0 0.0
    %901 = vmatmul.mubr.f32.gmra.mrb[0].mxu0 %v834
    %v902 = vpop.f32.mrb[0].mxu0
    %v903 = vadd.f32 0.0, %v902
    %v904 = vpop.f32.mrb[0].mxu0
    %905 = vdwg.mxu0
    %v907 = vsel %vm488, %v826, 0
    %909 = vmatprep.subr.mxu0 0.0
    %910 = vmatpush1.msra.mxu0 %v825
    %911 = vmatprep.subr.mxu0 0.0
    %912 = vmatpush1.msra.mxu0 0.0
    %913 = vmatprep.subr.mxu0 0.0
    %914 = vmatpush1.msra.mxu0 0.0
    %915 = vmatprep.subr.mxu0 0.0
    %916 = vmatpush1.msra.mxu0 0.0
    %917 = vmatprep.subr.mxu0 0.0
    %918 = vmatpush1.msra.mxu0 0.0
    %919 = vmatprep.subr.mxu0 0.0
    %920 = vmatpush1.msra.mxu0 0.0
    %921 = vmatprep.subr.mxu0 0.0
    %922 = vmatpush1.msra.mxu0 0.0
    %923 = vmatprep.subr.mxu0 0.0
    %924 = vmatpush1.msra.mxu0 0.0
    %925 = vmatprep.subr.mxu0 0.0
    %926 = vmatpush1.msra.mxu0 0.0
    %927 = vmatprep.subr.mxu0 0.0
    %928 = vmatpush1.msra.mxu0 0.0
    %929 = vmatprep.subr.mxu0 0.0
    %930 = vmatpush1.msra.mxu0 0.0
    %931 = vmatprep.subr.mxu0 0.0
    %932 = vmatpush1.msra.mxu0 0.0
    %933 = vmatprep.subr.mxu0 0.0
    %934 = vmatpush1.msra.mxu0 0.0
    %935 = vmatprep.subr.mxu0 0.0
    %936 = vmatpush1.msra.mxu0 0.0
    %937 = vmatprep.subr.mxu0 0.0
    %938 = vmatpush1.msra.mxu0 0.0
    %939 = vmatprep.subr.mxu0 0.0
    %940 = vmatpush1.msra.mxu0 0.0
    %941 = vmatprep.subr.mxu0 0.0
    %942 = vmatpush1.msra.mxu0 0.0
    %943 = vmatprep.subr.mxu0 0.0
    %944 = vmatpush1.msra.mxu0 0.0
    %945 = vmatprep.subr.mxu0 0.0
    %946 = vmatpush1.msra.mxu0 0.0
    %947 = vmatprep.subr.mxu0 0.0
    %948 = vmatpush1.msra.mxu0 0.0
    %949 = vmatprep.subr.mxu0 0.0
    %950 = vmatpush1.msra.mxu0 0.0
    %951 = vmatprep.subr.mxu0 0.0
    %952 = vmatpush1.msra.mxu0 0.0
    %953 = vmatprep.subr.mxu0 0.0
    %954 = vmatpush1.msra.mxu0 0.0
    %955 = vmatprep.subr.mxu0 0.0
    %956 = vmatpush1.msra.mxu0 0.0
    %957 = vmatprep.subr.mxu0 0.0
    %958 = vmatpush1.msra.mxu0 0.0
    %959 = vmatprep.subr.mxu0 0.0
    %960 = vmatpush1.msra.mxu0 0.0
    %961 = vmatprep.subr.mxu0 0.0
    %962 = vmatpush1.msra.mxu0 0.0
    %963 = vmatprep.subr.mxu0 0.0
    %964 = vmatpush1.msra.mxu0 0.0
    %965 = vmatprep.subr.mxu0 0.0
    %966 = vmatpush1.msra.mxu0 0.0
    %967 = vmatprep.subr.mxu0 0.0
    %968 = vmatpush1.msra.mxu0 0.0
    %969 = vmatprep.subr.mxu0 0.0
    %970 = vmatpush1.msra.mxu0 0.0
    %971 = vmatprep.subr.mxu0 0.0
    %972 = vmatpush1.msra.mxu0 0.0
    %973 = vmatprep.mubr.f32.mxu0 0.0
    %974 = vmatmul.mubr.f32.gmra.mrb[0].mxu0 %v907
    %v975 = vpop.f32.mrb[0].mxu0
    %v976 = vadd.f32 %v903, %v975
    %v977 = vpop.f32.mrb[0].mxu0
    %978 = vdwg.mxu0
    %s979 = scalar_lea.vmem %s7, 16
    %v980 = vld [vmem:[%s979] sm:$0xff]
    %981 = vrot.lane.b32.xlu0 %v825, 126
    %v982 = vpop.permute.xlu0 %981
    %v985 = vsel %vm488, %v980, 0
    %987 = vmatprep.subr.mxu0 0.0
    %988 = vmatpush1.msra.mxu0 %v982
    %989 = vmatprep.subr.mxu0 0.0
    %990 = vmatpush1.msra.mxu0 0.0
    %991 = vmatprep.subr.mxu0 0.0
    %992 = vmatpush1.msra.mxu0 0.0
    %993 = vmatprep.subr.mxu0 0.0
    %994 = vmatpush1.msra.mxu0 0.0
    %995 = vmatprep.subr.mxu0 0.0
    %996 = vmatpush1.msra.mxu0 0.0
    %997 = vmatprep.subr.mxu0 0.0
    %998 = vmatpush1.msra.mxu0 0.0
    %999 = vmatprep.subr.mxu0 0.0
    %1000 = vmatpush1.msra.mxu0 0.0
    %1001 = vmatprep.subr.mxu0 0.0
    %1002 = vmatpush1.msra.mxu0 0.0
    %1003 = vmatprep.subr.mxu0 0.0
    %1004 = vmatpush1.msra.mxu0 0.0
    %1005 = vmatprep.subr.mxu0 0.0
    %1006 = vmatpush1.msra.mxu0 0.0
    %1007 = vmatprep.subr.mxu0 0.0
    %1008 = vmatpush1.msra.mxu0 0.0
    %1009 = vmatprep.subr.mxu0 0.0
    %1010 = vmatpush1.msra.mxu0 0.0
    %1011 = vmatprep.subr.mxu0 0.0
    %1012 = vmatpush1.msra.mxu0 0.0
    %1013 = vmatprep.subr.mxu0 0.0
    %1014 = vmatpush1.msra.mxu0 0.0
    %1015 = vmatprep.subr.mxu0 0.0
    %1016 = vmatpush1.msra.mxu0 0.0
    %1017 = vmatprep.subr.mxu0 0.0
    %1018 = vmatpush1.msra.mxu0 0.0
    %1019 = vmatprep.subr.mxu0 0.0
    %1020 = vmatpush1.msra.mxu0 0.0
    %1021 = vmatprep.subr.mxu0 0.0
    %1022 = vmatpush1.msra.mxu0 0.0
    %1023 = vmatprep.subr.mxu0 0.0
    %1024 = vmatpush1.msra.mxu0 0.0
    %1025 = vmatprep.subr.mxu0 0.0
    %1026 = vmatpush1.msra.mxu0 0.0
    %1027 = vmatprep.subr.mxu0 0.0
    %1028 = vmatpush1.msra.mxu0 0.0
    %1029 = vmatprep.subr.mxu0 0.0
    %1030 = vmatpush1.msra.mxu0 0.0
    %1031 = vmatprep.subr.mxu0 0.0
    %1032 = vmatpush1.msra.mxu0 0.0
    %1033 = vmatprep.subr.mxu0 0.0
    %1034 = vmatpush1.msra.mxu0 0.0
    %1035 = vmatprep.subr.mxu0 0.0
    %1036 = vmatpush1.msra.mxu0 0.0
    %1037 = vmatprep.subr.mxu0 0.0
    %1038 = vmatpush1.msra.mxu0 0.0
    %1039 = vmatprep.subr.mxu0 0.0
    %1040 = vmatpush1.msra.mxu0 0.0
    %1041 = vmatprep.subr.mxu0 0.0
    %1042 = vmatpush1.msra.mxu0 0.0
    %1043 = vmatprep.subr.mxu0 0.0
    %1044 = vmatpush1.msra.mxu0 0.0
    %1045 = vmatprep.subr.mxu0 0.0
    %1046 = vmatpush1.msra.mxu0 0.0
    %1047 = vmatprep.subr.mxu0 0.0
    %1048 = vmatpush1.msra.mxu0 0.0
    %1049 = vmatprep.subr.mxu0 0.0
    %1050 = vmatpush1.msra.mxu0 0.0
    %1051 = vmatprep.mubr.f32.mxu0 0.0
    %1052 = vmatmul.mubr.f32.gmra.mrb[0].mxu0 %v985
    %v1053 = vpop.f32.mrb[0].mxu0
    %v1054 = vadd.f32 0.0, %v1053
    %v1055 = vpop.f32.mrb[0].mxu0
    %1056 = vdwg.mxu0
    %v1057 = vadd.f32 %v976, %v1054
    %v1058 = vld [vmem:[%s8] sm:$0xff]
    %1060 = vset.pattern.permute.xlu0 0
    %1061 = vperm.xlu0 %1060, %v1058
    %v1062 = vpop.permute.xlu0 %1061
    %v1064 = vadd.f32 %v1057, %v1062
    %1066 = vrot.lane.b32.xlu0 %v1064, 127
    %v1067 = vpop.permute.xlu0 %1066
    %v1069 = vmax.f32 %v1064, %v1067
    %1070 = vrot.lane.b32.xlu0 %v1064, 126
    %v1071 = vpop.permute.xlu0 %1070
    %v1073 = vmax.f32 %v1069, %v1071
    %v1074 = vld [vmem:[%s9] sm:$0xff]
    %v1075 = vld [vmem:[%s9 + $0x8] sm:$0xff]
    %v1076 = vld [vmem:[%s9 + $0x10] sm:$0xff]
    %v1077 = vld [vmem:[%s9 + $0x18] sm:$0xff]
    %v1078 = vld [vmem:[%s9 + $0x20] sm:$0xff]
    %v1079 = vld [vmem:[%s9 + $0x28] sm:$0xff]
    %v1080 = vld [vmem:[%s9 + $0x30] sm:$0xff]
    %v1081 = vld [vmem:[%s9 + $0x38] sm:$0x1]
    %vm1082 = vcmask 465920
    %v1084 = vsel %vm1082, %v1073, 0
    %vm1086 = vcmask 1040384
    %v1088 = vsel %vm1086, %v1081, 0
    %1090 = vmatprep.subr.mxu0 0.0
    %1091 = vmatpush1.msra.mxu0 %v1074
    %1092 = vmatprep.subr.mxu0 0.0
    %1093 = vmatpush1.msra.mxu0 %v1075
    %1094 = vmatprep.subr.mxu0 0.0
    %1095 = vmatpush1.msra.mxu0 %v1076
    %1096 = vmatprep.subr.mxu0 0.0
    %1097 = vmatpush1.msra.mxu0 %v1077
    %1098 = vmatprep.subr.mxu0 0.0
    %1099 = vmatpush1.msra.mxu0 %v1078
    %1100 = vmatprep.subr.mxu0 0.0
    %1101 = vmatpush1.msra.mxu0 %v1079
    %1102 = vmatprep.subr.mxu0 0.0
    %1103 = vmatpush1.msra.mxu0 %v1080
    %1104 = vmatprep.subr.mxu0 0.0
    %1105 = vmatpush1.msra.mxu0 %v1088
    %1106 = vmatprep.subr.mxu0 0.0
    %1107 = vmatpush1.msra.mxu0 0.0
    %1108 = vmatprep.subr.mxu0 0.0
    %1109 = vmatpush1.msra.mxu0 0.0
    %1110 = vmatprep.subr.mxu0 0.0
    %1111 = vmatpush1.msra.mxu0 0.0
    %1112 = vmatprep.subr.mxu0 0.0
    %1113 = vmatpush1.msra.mxu0 0.0
    %1114 = vmatprep.subr.mxu0 0.0
    %1115 = vmatpush1.msra.mxu0 0.0
    %1116 = vmatprep.subr.mxu0 0.0
    %1117 = vmatpush1.msra.mxu0 0.0
    %1118 = vmatprep.subr.mxu0 0.0
    %1119 = vmatpush1.msra.mxu0 0.0
    %1120 = vmatprep.subr.mxu0 0.0
    %1121 = vmatpush1.msra.mxu0 0.0
    %1122 = vmatprep.subr.mxu0 0.0
    %1123 = vmatpush1.msra.mxu0 0.0
    %1124 = vmatprep.subr.mxu0 0.0
    %1125 = vmatpush1.msra.mxu0 0.0
    %1126 = vmatprep.subr.mxu0 0.0
    %1127 = vmatpush1.msra.mxu0 0.0
    %1128 = vmatprep.subr.mxu0 0.0
    %1129 = vmatpush1.msra.mxu0 0.0
    %1130 = vmatprep.subr.mxu0 0.0
    %1131 = vmatpush1.msra.mxu0 0.0
    %1132 = vmatprep.subr.mxu0 0.0
    %1133 = vmatpush1.msra.mxu0 0.0
    %1134 = vmatprep.subr.mxu0 0.0
    %1135 = vmatpush1.msra.mxu0 0.0
    %1136 = vmatprep.subr.mxu0 0.0
    %1137 = vmatpush1.msra.mxu0 0.0
    %1138 = vmatprep.subr.mxu0 0.0
    %1139 = vmatpush1.msra.mxu0 0.0
    %1140 = vmatprep.subr.mxu0 0.0
    %1141 = vmatpush1.msra.mxu0 0.0
    %1142 = vmatprep.subr.mxu0 0.0
    %1143 = vmatpush1.msra.mxu0 0.0
    %1144 = vmatprep.subr.mxu0 0.0
    %1145 = vmatpush1.msra.mxu0 0.0
    %1146 = vmatprep.subr.mxu0 0.0
    %1147 = vmatpush1.msra.mxu0 0.0
    %1148 = vmatprep.subr.mxu0 0.0
    %1149 = vmatpush1.msra.mxu0 0.0
    %1150 = vmatprep.subr.mxu0 0.0
    %1151 = vmatpush1.msra.mxu0 0.0
    %1152 = vmatprep.subr.mxu0 0.0
    %1153 = vmatpush1.msra.mxu0 0.0
    %1154 = vmatprep.mubr.f32.mxu0 0.0
    %1155 = vmatmul.mubr.f32.gmra.mrb[0].mxu0 %v1084
    %v1156 = vpop.f32.mrb[0].mxu0
    %v1157 = vadd.f32 0.0, %v1156
    %v1158 = vpop.f32.mrb[0].mxu0
    %1159 = vdwg.mxu0
    %vm1160 = vcmp.ge.f32.partialorder %v1157, 0.0
    %v1161 = vmul.f32 %v1157, 0.01
    %v1162 = vsel %vm1160, %v1157, %v1161
    %v1163 = vld [vmem:[%s10] sm:$0x3]
    %s1164 = scalar_lea.vmem %s10, 2
    %v1165 = vld [vmem:[%s1164] sm:$0x3]
    %1167 = vrot.lane.b32.xlu0 %v1162, 127
    %v1168 = vpop.permute.xlu0 %1167
    %v1171 = vsel %vm488, %v1165, 0
    %1173 = vmatprep.subr.mxu0 0.0
    %1174 = vmatpush1.msra.mxu0 %v1168
    %1175 = vmatprep.subr.mxu0 0.0
    %1176 = vmatpush1.msra.mxu0 0.0
    %1177 = vmatprep.subr.mxu0 0.0
    %1178 = vmatpush1.msra.mxu0 0.0
    %1179 = vmatprep.subr.mxu0 0.0
    %1180 = vmatpush1.msra.mxu0 0.0
    %1181 = vmatprep.subr.mxu0 0.0
    %1182 = vmatpush1.msra.mxu0 0.0
    %1183 = vmatprep.subr.mxu0 0.0
    %1184 = vmatpush1.msra.mxu0 0.0
    %1185 = vmatprep.subr.mxu0 0.0
    %1186 = vmatpush1.msra.mxu0 0.0
    %1187 = vmatprep.subr.mxu0 0.0
    %1188 = vmatpush1.msra.mxu0 0.0
    %1189 = vmatprep.subr.mxu0 0.0
    %1190 = vmatpush1.msra.mxu0 0.0
    %1191 = vmatprep.subr.mxu0 0.0
    %1192 = vmatpush1.msra.mxu0 0.0
    %1193 = vmatprep.subr.mxu0 0.0
    %1194 = vmatpush1.msra.mxu0 0.0
    %1195 = vmatprep.subr.mxu0 0.0
    %1196 = vmatpush1.msra.mxu0 0.0
    %1197 = vmatprep.subr.mxu0 0.0
    %1198 = vmatpush1.msra.mxu0 0.0
    %1199 = vmatprep.subr.mxu0 0.0
    %1200 = vmatpush1.msra.mxu0 0.0
    %1201 = vmatprep.subr.mxu0 0.0
    %1202 = vmatpush1.msra.mxu0 0.0
    %1203 = vmatprep.subr.mxu0 0.0
    %1204 = vmatpush1.msra.mxu0 0.0
    %1205 = vmatprep.subr.mxu0 0.0
    %1206 = vmatpush1.msra.mxu0 0.0
    %1207 = vmatprep.subr.mxu0 0.0
    %1208 = vmatpush1.msra.mxu0 0.0
    %1209 = vmatprep.subr.mxu0 0.0
    %1210 = vmatpush1.msra.mxu0 0.0
    %1211 = vmatprep.subr.mxu0 0.0
    %1212 = vmatpush1.msra.mxu0 0.0
    %1213 = vmatprep.subr.mxu0 0.0
    %1214 = vmatpush1.msra.mxu0 0.0
    %1215 = vmatprep.subr.mxu0 0.0
    %1216 = vmatpush1.msra.mxu0 0.0
    %1217 = vmatprep.subr.mxu0 0.0
    %1218 = vmatpush1.msra.mxu0 0.0
    %1219 = vmatprep.subr.mxu0 0.0
    %1220 = vmatpush1.msra.mxu0 0.0
    %1221 = vmatprep.subr.mxu0 0.0
    %1222 = vmatpush1.msra.mxu0 0.0
    %1223 = vmatprep.subr.mxu0 0.0
    %1224 = vmatpush1.msra.mxu0 0.0
    %1225 = vmatprep.subr.mxu0 0.0
    %1226 = vmatpush1.msra.mxu0 0.0
    %1227 = vmatprep.subr.mxu0 0.0
    %1228 = vmatpush1.msra.mxu0 0.0
    %1229 = vmatprep.subr.mxu0 0.0
    %1230 = vmatpush1.msra.mxu0 0.0
    %1231 = vmatprep.subr.mxu0 0.0
    %1232 = vmatpush1.msra.mxu0 0.0
    %1233 = vmatprep.subr.mxu0 0.0
    %1234 = vmatpush1.msra.mxu0 0.0
    %1235 = vmatprep.subr.mxu0 0.0
    %1236 = vmatpush1.msra.mxu0 0.0
    %1237 = vmatprep.mubr.f32.mxu0 0.0
    %1238 = vmatmul.mubr.f32.gmra.mrb[0].mxu0 %v1171
    %v1239 = vpop.f32.mrb[0].mxu0
    %v1240 = vadd.f32 0.0, %v1239
    %v1241 = vpop.f32.mrb[0].mxu0
    %1242 = vdwg.mxu0
    %v1244 = vsel %vm488, %v1163, 0
    %1246 = vmatprep.subr.mxu0 0.0
    %1247 = vmatpush1.msra.mxu0 %v1162
    %1248 = vmatprep.subr.mxu0 0.0
    %1249 = vmatpush1.msra.mxu0 0.0
    %1250 = vmatprep.subr.mxu0 0.0
    %1251 = vmatpush1.msra.mxu0 0.0
    %1252 = vmatprep.subr.mxu0 0.0
    %1253 = vmatpush1.msra.mxu0 0.0
    %1254 = vmatprep.subr.mxu0 0.0
    %1255 = vmatpush1.msra.mxu0 0.0
    %1256 = vmatprep.subr.mxu0 0.0
    %1257 = vmatpush1.msra.mxu0 0.0
    %1258 = vmatprep.subr.mxu0 0.0
    %1259 = vmatpush1.msra.mxu0 0.0
    %1260 = vmatprep.subr.mxu0 0.0
    %1261 = vmatpush1.msra.mxu0 0.0
    %1262 = vmatprep.subr.mxu0 0.0
    %1263 = vmatpush1.msra.mxu0 0.0
    %1264 = vmatprep.subr.mxu0 0.0
    %1265 = vmatpush1.msra.mxu0 0.0
    %1266 = vmatprep.subr.mxu0 0.0
    %1267 = vmatpush1.msra.mxu0 0.0
    %1268 = vmatprep.subr.mxu0 0.0
    %1269 = vmatpush1.msra.mxu0 0.0
    %1270 = vmatprep.subr.mxu0 0.0
    %1271 = vmatpush1.msra.mxu0 0.0
    %1272 = vmatprep.subr.mxu0 0.0
    %1273 = vmatpush1.msra.mxu0 0.0
    %1274 = vmatprep.subr.mxu0 0.0
    %1275 = vmatpush1.msra.mxu0 0.0
    %1276 = vmatprep.subr.mxu0 0.0
    %1277 = vmatpush1.msra.mxu0 0.0
    %1278 = vmatprep.subr.mxu0 0.0
    %1279 = vmatpush1.msra.mxu0 0.0
    %1280 = vmatprep.subr.mxu0 0.0
    %1281 = vmatpush1.msra.mxu0 0.0
    %1282 = vmatprep.subr.mxu0 0.0
    %1283 = vmatpush1.msra.mxu0 0.0
    %1284 = vmatprep.subr.mxu0 0.0
    %1285 = vmatpush1.msra.mxu0 0.0
    %1286 = vmatprep.subr.mxu0 0.0
    %1287 = vmatpush1.msra.mxu0 0.0
    %1288 = vmatprep.subr.mxu0 0.0
    %1289 = vmatpush1.msra.mxu0 0.0
    %1290 = vmatprep.subr.mxu0 0.0
    %1291 = vmatpush1.msra.mxu0 0.0
    %1292 = vmatprep.subr.mxu0 0.0
    %1293 = vmatpush1.msra.mxu0 0.0
    %1294 = vmatprep.subr.mxu0 0.0
    %1295 = vmatpush1.msra.mxu0 0.0
    %1296 = vmatprep.subr.mxu0 0.0
    %1297 = vmatpush1.msra.mxu0 0.0
    %1298 = vmatprep.subr.mxu0 0.0
    %1299 = vmatpush1.msra.mxu0 0.0
    %1300 = vmatprep.subr.mxu0 0.0
    %1301 = vmatpush1.msra.mxu0 0.0
    %1302 = vmatprep.subr.mxu0 0.0
    %1303 = vmatpush1.msra.mxu0 0.0
    %1304 = vmatprep.subr.mxu0 0.0
    %1305 = vmatpush1.msra.mxu0 0.0
    %1306 = vmatprep.subr.mxu0 0.0
    %1307 = vmatpush1.msra.mxu0 0.0
    %1308 = vmatprep.subr.mxu0 0.0
    %1309 = vmatpush1.msra.mxu0 0.0
    %1310 = vmatprep.mubr.f32.mxu0 0.0
    %1311 = vmatmul.mubr.f32.gmra.mrb[0].mxu0 %v1244
    %v1312 = vpop.f32.mrb[0].mxu0
    %v1313 = vadd.f32 %v1240, %v1312
    %v1314 = vpop.f32.mrb[0].mxu0
    %1315 = vdwg.mxu0
    %s1316 = scalar_lea.vmem %s10, 4
    %v1317 = vld [vmem:[%s1316] sm:$0x3]
    %1318 = vrot.lane.b32.xlu0 %v1162, 126
    %v1319 = vpop.permute.xlu0 %1318
    %v1322 = vsel %vm488, %v1317, 0
    %1324 = vmatprep.subr.mxu0 0.0
    %1325 = vmatpush1.msra.mxu0 %v1319
    %1326 = vmatprep.subr.mxu0 0.0
    %1327 = vmatpush1.msra.mxu0 0.0
    %1328 = vmatprep.subr.mxu0 0.0
    %1329 = vmatpush1.msra.mxu0 0.0
    %1330 = vmatprep.subr.mxu0 0.0
    %1331 = vmatpush1.msra.mxu0 0.0
    %1332 = vmatprep.subr.mxu0 0.0
    %1333 = vmatpush1.msra.mxu0 0.0
    %1334 = vmatprep.subr.mxu0 0.0
    %1335 = vmatpush1.msra.mxu0 0.0
    %1336 = vmatprep.subr.mxu0 0.0
    %1337 = vmatpush1.msra.mxu0 0.0
    %1338 = vmatprep.subr.mxu0 0.0
    %1339 = vmatpush1.msra.mxu0 0.0
    %1340 = vmatprep.subr.mxu0 0.0
    %1341 = vmatpush1.msra.mxu0 0.0
    %1342 = vmatprep.subr.mxu0 0.0
    %1343 = vmatpush1.msra.mxu0 0.0
    %1344 = vmatprep.subr.mxu0 0.0
    %1345 = vmatpush1.msra.mxu0 0.0
    %1346 = vmatprep.subr.mxu0 0.0
    %1347 = vmatpush1.msra.mxu0 0.0
    %1348 = vmatprep.subr.mxu0 0.0
    %1349 = vmatpush1.msra.mxu0 0.0
    %1350 = vmatprep.subr.mxu0 0.0
    %1351 = vmatpush1.msra.mxu0 0.0
    %1352 = vmatprep.subr.mxu0 0.0
    %1353 = vmatpush1.msra.mxu0 0.0
    %1354 = vmatprep.subr.mxu0 0.0
    %1355 = vmatpush1.msra.mxu0 0.0
    %1356 = vmatprep.subr.mxu0 0.0
    %1357 = vmatpush1.msra.mxu0 0.0
    %1358 = vmatprep.subr.mxu0 0.0
    %1359 = vmatpush1.msra.mxu0 0.0
    %1360 = vmatprep.subr.mxu0 0.0
    %1361 = vmatpush1.msra.mxu0 0.0
    %1362 = vmatprep.subr.mxu0 0.0
    %1363 = vmatpush1.msra.mxu0 0.0
    %1364 = vmatprep.subr.mxu0 0.0
    %1365 = vmatpush1.msra.mxu0 0.0
    %1366 = vmatprep.subr.mxu0 0.0
    %1367 = vmatpush1.msra.mxu0 0.0
    %1368 = vmatprep.subr.mxu0 0.0
    %1369 = vmatpush1.msra.mxu0 0.0
    %1370 = vmatprep.subr.mxu0 0.0
    %1371 = vmatpush1.msra.mxu0 0.0
    %1372 = vmatprep.subr.mxu0 0.0
    %1373 = vmatpush1.msra.mxu0 0.0
    %1374 = vmatprep.subr.mxu0 0.0
    %1375 = vmatpush1.msra.mxu0 0.0
    %1376 = vmatprep.subr.mxu0 0.0
    %1377 = vmatpush1.msra.mxu0 0.0
    %1378 = vmatprep.subr.mxu0 0.0
    %1379 = vmatpush1.msra.mxu0 0.0
    %1380 = vmatprep.subr.mxu0 0.0
    %1381 = vmatpush1.msra.mxu0 0.0
    %1382 = vmatprep.subr.mxu0 0.0
    %1383 = vmatpush1.msra.mxu0 0.0
    %1384 = vmatprep.subr.mxu0 0.0
    %1385 = vmatpush1.msra.mxu0 0.0
    %1386 = vmatprep.subr.mxu0 0.0
    %1387 = vmatpush1.msra.mxu0 0.0
    %1388 = vmatprep.mubr.f32.mxu0 0.0
    %1389 = vmatmul.mubr.f32.gmra.mrb[0].mxu0 %v1322
    %v1390 = vpop.f32.mrb[0].mxu0
    %v1391 = vadd.f32 0.0, %v1390
    %v1392 = vpop.f32.mrb[0].mxu0
    %1393 = vdwg.mxu0
    %v1394 = vadd.f32 %v1313, %v1391
    %v1395 = vld [vmem:[%s11] sm:$0x3]
    %1397 = vset.pattern.permute.xlu0 0
    %1398 = vperm.xlu0 %1397, %v1395
    %v1399 = vpop.permute.xlu0 %1398
    %v1401 = vadd.f32 %v1394, %v1399
    %1403 = vrot.lane.b32.xlu0 %v1401, 127
    %v1404 = vpop.permute.xlu0 %1403
    %v1406 = vmax.f32 %v1401, %v1404
    %1407 = vrot.lane.b32.xlu0 %v1401, 126
    %v1408 = vpop.permute.xlu0 %1407
    %v1410 = vmax.f32 %v1406, %v1408
    %v1411 = vld [vmem:[%s12] sm:$0xff]
    %v1412 = vld [vmem:[%s12 + $0x8] sm:$0xff]
    %v1413 = vld [vmem:[%s12 + $0x10] sm:$0xff]
    %v1414 = vld [vmem:[%s12 + $0x18] sm:$0x1]
    %vm1415 = vcmask 203776
    %v1417 = vsel %vm1415, %v1410, 0
    %v1420 = vsel %vm1086, %v1414, 0
    %1422 = vmatprep.subr.mxu0 0.0
    %1423 = vmatpush1.msra.mxu0 %v1411
    %1424 = vmatprep.subr.mxu0 0.0
    %1425 = vmatpush1.msra.mxu0 %v1412
    %1426 = vmatprep.subr.mxu0 0.0
    %1427 = vmatpush1.msra.mxu0 %v1413
    %1428 = vmatprep.subr.mxu0 0.0
    %1429 = vmatpush1.msra.mxu0 %v1420
    %1430 = vmatprep.subr.mxu0 0.0
    %1431 = vmatpush1.msra.mxu0 0.0
    %1432 = vmatprep.subr.mxu0 0.0
    %1433 = vmatpush1.msra.mxu0 0.0
    %1434 = vmatprep.subr.mxu0 0.0
    %1435 = vmatpush1.msra.mxu0 0.0
    %1436 = vmatprep.subr.mxu0 0.0
    %1437 = vmatpush1.msra.mxu0 0.0
    %1438 = vmatprep.subr.mxu0 0.0
    %1439 = vmatpush1.msra.mxu0 0.0
    %1440 = vmatprep.subr.mxu0 0.0
    %1441 = vmatpush1.msra.mxu0 0.0
    %1442 = vmatprep.subr.mxu0 0.0
    %1443 = vmatpush1.msra.mxu0 0.0
    %1444 = vmatprep.subr.mxu0 0.0
    %1445 = vmatpush1.msra.mxu0 0.0
    %1446 = vmatprep.subr.mxu0 0.0
    %1447 = vmatpush1.msra.mxu0 0.0
    %1448 = vmatprep.subr.mxu0 0.0
    %1449 = vmatpush1.msra.mxu0 0.0
    %1450 = vmatprep.subr.mxu0 0.0
    %1451 = vmatpush1.msra.mxu0 0.0
    %1452 = vmatprep.subr.mxu0 0.0
    %1453 = vmatpush1.msra.mxu0 0.0
    %1454 = vmatprep.subr.mxu0 0.0
    %1455 = vmatpush1.msra.mxu0 0.0
    %1456 = vmatprep.subr.mxu0 0.0
    %1457 = vmatpush1.msra.mxu0 0.0
    %1458 = vmatprep.subr.mxu0 0.0
    %1459 = vmatpush1.msra.mxu0 0.0
    %1460 = vmatprep.subr.mxu0 0.0
    %1461 = vmatpush1.msra.mxu0 0.0
    %1462 = vmatprep.subr.mxu0 0.0
    %1463 = vmatpush1.msra.mxu0 0.0
    %1464 = vmatprep.subr.mxu0 0.0
    %1465 = vmatpush1.msra.mxu0 0.0
    %1466 = vmatprep.subr.mxu0 0.0
    %1467 = vmatpush1.msra.mxu0 0.0
    %1468 = vmatprep.subr.mxu0 0.0
    %1469 = vmatpush1.msra.mxu0 0.0
    %1470 = vmatprep.subr.mxu0 0.0
    %1471 = vmatpush1.msra.mxu0 0.0
    %1472 = vmatprep.subr.mxu0 0.0
    %1473 = vmatpush1.msra.mxu0 0.0
    %1474 = vmatprep.subr.mxu0 0.0
    %1475 = vmatpush1.msra.mxu0 0.0
    %1476 = vmatprep.subr.mxu0 0.0
    %1477 = vmatpush1.msra.mxu0 0.0
    %1478 = vmatprep.subr.mxu0 0.0
    %1479 = vmatpush1.msra.mxu0 0.0
    %1480 = vmatprep.subr.mxu0 0.0
    %1481 = vmatpush1.msra.mxu0 0.0
    %1482 = vmatprep.subr.mxu0 0.0
    %1483 = vmatpush1.msra.mxu0 0.0
    %1484 = vmatprep.subr.mxu0 0.0
    %1485 = vmatpush1.msra.mxu0 0.0
    %1486 = vmatprep.mubr.f32.mxu0 0.0
    %1487 = vmatmul.mubr.f32.gmra.mrb[0].mxu0 %v1417
    %v1488 = vpop.f32.mrb[0].mxu0
    %v1489 = vadd.f32 0.0, %v1488
    %v1490 = vpop.f32.mrb[0].mxu0
    %1491 = vdwg.mxu0
    %vm1492 = vcmp.ge.f32.partialorder %v1489, 0.0
    %v1493 = vmul.f32 %v1489, 0.01
    %v1494 = vsel %vm1492, %v1489, %v1493
    %v1495 = vld [vmem:[%s13] sm:$0xff]
    %v1496 = vld [vmem:[%s13 + $0x8] sm:$0x1f]
    %v1497 = vld [vmem:[%s14] sm:$0x1]
    %v1499 = vlaneseq
    %v1500 = vshrl.u32 %v1499, 7
    %v1501 = vsub.s32 0, %v1500
    %v1502 = vrot.slane %v1497, %v1501
    %vm1504 = vcmask 105472
    %v1506 = vsel %vm1504, %v1494, 0
    %vm1508 = vcmask 1044480
    %v1510 = vsel %vm1508, %v1496, 0
    %1512 = vmatprep.subr.mxu0 0.0
    %1513 = vmatpush1.msra.mxu0 %v1495
    %1514 = vmatprep.subr.mxu0 0.0
    %1515 = vmatpush1.msra.mxu0 %v1510
    %1516 = vmatprep.subr.mxu0 0.0
    %1517 = vmatpush1.msra.mxu0 0.0
    %1518 = vmatprep.subr.mxu0 0.0
    %1519 = vmatpush1.msra.mxu0 0.0
    %1520 = vmatprep.subr.mxu0 0.0
    %1521 = vmatpush1.msra.mxu0 0.0
    %1522 = vmatprep.subr.mxu0 0.0
    %1523 = vmatpush1.msra.mxu0 0.0
    %1524 = vmatprep.subr.mxu0 0.0
    %1525 = vmatpush1.msra.mxu0 0.0
    %1526 = vmatprep.subr.mxu0 0.0
    %1527 = vmatpush1.msra.mxu0 0.0
    %1528 = vmatprep.subr.mxu0 0.0
    %1529 = vmatpush1.msra.mxu0 0.0
    %1530 = vmatprep.subr.mxu0 0.0
    %1531 = vmatpush1.msra.mxu0 0.0
    %1532 = vmatprep.subr.mxu0 0.0
    %1533 = vmatpush1.msra.mxu0 0.0
    %1534 = vmatprep.subr.mxu0 0.0
    %1535 = vmatpush1.msra.mxu0 0.0
    %1536 = vmatprep.subr.mxu0 0.0
    %1537 = vmatpush1.msra.mxu0 0.0
    %1538 = vmatprep.subr.mxu0 0.0
    %1539 = vmatpush1.msra.mxu0 0.0
    %1540 = vmatprep.subr.mxu0 0.0
    %1541 = vmatpush1.msra.mxu0 0.0
    %1542 = vmatprep.subr.mxu0 0.0
    %1543 = vmatpush1.msra.mxu0 0.0
    %1544 = vmatprep.subr.mxu0 0.0
    %1545 = vmatpush1.msra.mxu0 0.0
    %1546 = vmatprep.subr.mxu0 0.0
    %1547 = vmatpush1.msra.mxu0 0.0
    %1548 = vmatprep.subr.mxu0 0.0
    %1549 = vmatpush1.msra.mxu0 0.0
    %1550 = vmatprep.subr.mxu0 0.0
    %1551 = vmatpush1.msra.mxu0 0.0
    %1552 = vmatprep.subr.mxu0 0.0
    %1553 = vmatpush1.msra.mxu0 0.0
    %1554 = vmatprep.subr.mxu0 0.0
    %1555 = vmatpush1.msra.mxu0 0.0
    %1556 = vmatprep.subr.mxu0 0.0
    %1557 = vmatpush1.msra.mxu0 0.0
    %1558 = vmatprep.subr.mxu0 0.0
    %1559 = vmatpush1.msra.mxu0 0.0
    %1560 = vmatprep.subr.mxu0 0.0
    %1561 = vmatpush1.msra.mxu0 0.0
    %1562 = vmatprep.subr.mxu0 0.0
    %1563 = vmatpush1.msra.mxu0 0.0
    %1564 = vmatprep.subr.mxu0 0.0
    %1565 = vmatpush1.msra.mxu0 0.0
    %1566 = vmatprep.subr.mxu0 0.0
    %1567 = vmatpush1.msra.mxu0 0.0
    %1568 = vmatprep.subr.mxu0 0.0
    %1569 = vmatpush1.msra.mxu0 0.0
    %1570 = vmatprep.subr.mxu0 0.0
    %1571 = vmatpush1.msra.mxu0 0.0
    %1572 = vmatprep.subr.mxu0 0.0
    %1573 = vmatpush1.msra.mxu0 0.0
    %1574 = vmatprep.subr.mxu0 0.0
    %1575 = vmatpush1.msra.mxu0 0.0
    %1576 = vmatprep.mubr.f32.mxu0 0.0
    %1577 = vmatmul.mubr.f32.gmra.mrb[0].mxu0 %v1506
    %v1578 = vpop.f32.mrb[0].mxu0
    %v1579 = vadd.f32 %v1502, %v1578
    %v1580 = vpop.f32.mrb[0].mxu0
    %1581 = vdwg.mxu0
    %vm1582 = vcmp.ge.f32.partialorder %v1579, 0.0
    %v1583 = vmul.f32 %v1579, 0.01
    %v1584 = vsel %vm1582, %v1579, %v1583
    %v1585 = vld [vmem:[%s15] sm:$0xff]
    %v1586 = vld [vmem:[%s15 + $0x8] sm:$0xff]
    %v1587 = vld [vmem:[%s15 + $0x10] sm:$0xff]
    %v1588 = vld [vmem:[%s15 + $0x18] sm:$0xff]
    %v1589 = vld [vmem:[%s16] sm:$0x1]
    %v1591 = vlaneseq
    %v1592 = vshrl.u32 %v1591, 7
    %v1593 = vsub.s32 0, %v1592
    %v1594 = vrot.slane %v1589, %v1593
    %vm1596 = vcmask 261120
    %v1598 = vsel %vm1596, %v1584, 0
    %1600 = vmatprep.subr.mxu0 0.0
    %1601 = vmatpush1.msra.mxu0 %v1585
    %1602 = vmatprep.subr.mxu0 0.0
    %1603 = vmatpush1.msra.mxu0 %v1586
    %1604 = vmatprep.subr.mxu0 0.0
    %1605 = vmatpush1.msra.mxu0 %v1587
    %1606 = vmatprep.subr.mxu0 0.0
    %1607 = vmatpush1.msra.mxu0 %v1588
    %1608 = vmatprep.subr.mxu0 0.0
    %1609 = vmatpush1.msra.mxu0 0.0
    %1610 = vmatprep.subr.mxu0 0.0
    %1611 = vmatpush1.msra.mxu0 0.0
    %1612 = vmatprep.subr.mxu0 0.0
    %1613 = vmatpush1.msra.mxu0 0.0
    %1614 = vmatprep.subr.mxu0 0.0
    %1615 = vmatpush1.msra.mxu0 0.0
    %1616 = vmatprep.subr.mxu0 0.0
    %1617 = vmatpush1.msra.mxu0 0.0
    %1618 = vmatprep.subr.mxu0 0.0
    %1619 = vmatpush1.msra.mxu0 0.0
    %1620 = vmatprep.subr.mxu0 0.0
    %1621 = vmatpush1.msra.mxu0 0.0
    %1622 = vmatprep.subr.mxu0 0.0
    %1623 = vmatpush1.msra.mxu0 0.0
    %1624 = vmatprep.subr.mxu0 0.0
    %1625 = vmatpush1.msra.mxu0 0.0
    %1626 = vmatprep.subr.mxu0 0.0
    %1627 = vmatpush1.msra.mxu0 0.0
    %1628 = vmatprep.subr.mxu0 0.0
    %1629 = vmatpush1.msra.mxu0 0.0
    %1630 = vmatprep.subr.mxu0 0.0
    %1631 = vmatpush1.msra.mxu0 0.0
    %1632 = vmatprep.subr.mxu0 0.0
    %1633 = vmatpush1.msra.mxu0 0.0
    %1634 = vmatprep.subr.mxu0 0.0
    %1635 = vmatpush1.msra.mxu0 0.0
    %1636 = vmatprep.subr.mxu0 0.0
    %1637 = vmatpush1.msra.mxu0 0.0
    %1638 = vmatprep.subr.mxu0 0.0
    %1639 = vmatpush1.msra.mxu0 0.0
    %1640 = vmatprep.subr.mxu0 0.0
    %1641 = vmatpush1.msra.mxu0 0.0
    %1642 = vmatprep.subr.mxu0 0.0
    %1643 = vmatpush1.msra.mxu0 0.0
    %1644 = vmatprep.subr.mxu0 0.0
    %1645 = vmatpush1.msra.mxu0 0.0
    %1646 = vmatprep.subr.mxu0 0.0
    %1647 = vmatpush1.msra.mxu0 0.0
    %1648 = vmatprep.subr.mxu0 0.0
    %1649 = vmatpush1.msra.mxu0 0.0
    %1650 = vmatprep.subr.mxu0 0.0
    %1651 = vmatpush1.msra.mxu0 0.0
    %1652 = vmatprep.subr.mxu0 0.0
    %1653 = vmatpush1.msra.mxu0 0.0
    %1654 = vmatprep.subr.mxu0 0.0
    %1655 = vmatpush1.msra.mxu0 0.0
    %1656 = vmatprep.subr.mxu0 0.0
    %1657 = vmatpush1.msra.mxu0 0.0
    %1658 = vmatprep.subr.mxu0 0.0
    %1659 = vmatpush1.msra.mxu0 0.0
    %1660 = vmatprep.subr.mxu0 0.0
    %1661 = vmatpush1.msra.mxu0 0.0
    %1662 = vmatprep.subr.mxu0 0.0
    %1663 = vmatpush1.msra.mxu0 0.0
    %1664 = vmatprep.mubr.f32.mxu0 0.0
    %1665 = vmatmul.mubr.f32.gmra.mrb[0].mxu0 %v1598
    %v1666 = vpop.f32.mrb[0].mxu0
    %v1667 = vadd.f32 %v1594, %v1666
    %v1668 = vpop.f32.mrb[0].mxu0
    %1669 = vdwg.mxu0
    %vm1670 = vcmp.ge.f32.partialorder %v1667, 0.0
    %v1671 = vmul.f32 %v1667, 0.01
    %v1672 = vsel %vm1670, %v1667, %v1671
    %v1673 = vld [vmem:[%s17] sm:$0xff]
    %v1674 = vld [vmem:[%s17 + $0x8] sm:$0xff]
    %v1675 = vld [vmem:[%s17 + $0x10] sm:$0xff]
    %v1676 = vld [vmem:[%s17 + $0x18] sm:$0xff]
    %v1677 = vld [vmem:[%s18] sm:$0x1]
    %v1679 = vlaneseq
    %v1680 = vshrl.u32 %v1679, 7
    %v1681 = vsub.s32 0, %v1680
    %v1682 = vrot.slane %v1677, %v1681
    %v1685 = vsel %vm1596, %v1672, 0
    %1687 = vmatprep.subr.mxu0 0.0
    %1688 = vmatpush1.msra.mxu0 %v1673
    %1689 = vmatprep.subr.mxu0 0.0
    %1690 = vmatpush1.msra.mxu0 %v1674
    %1691 = vmatprep.subr.mxu0 0.0
    %1692 = vmatpush1.msra.mxu0 %v1675
    %1693 = vmatprep.subr.mxu0 0.0
    %1694 = vmatpush1.msra.mxu0 %v1676
    %1695 = vmatprep.subr.mxu0 0.0
    %1696 = vmatpush1.msra.mxu0 0.0
    %1697 = vmatprep.subr.mxu0 0.0
    %1698 = vmatpush1.msra.mxu0 0.0
    %1699 = vmatprep.subr.mxu0 0.0
    %1700 = vmatpush1.msra.mxu0 0.0
    %1701 = vmatprep.subr.mxu0 0.0
    %1702 = vmatpush1.msra.mxu0 0.0
    %1703 = vmatprep.subr.mxu0 0.0
    %1704 = vmatpush1.msra.mxu0 0.0
    %1705 = vmatprep.subr.mxu0 0.0
    %1706 = vmatpush1.msra.mxu0 0.0
    %1707 = vmatprep.subr.mxu0 0.0
    %1708 = vmatpush1.msra.mxu0 0.0
    %1709 = vmatprep.subr.mxu0 0.0
    %1710 = vmatpush1.msra.mxu0 0.0
    %1711 = vmatprep.subr.mxu0 0.0
    %1712 = vmatpush1.msra.mxu0 0.0
    %1713 = vmatprep.subr.mxu0 0.0
    %1714 = vmatpush1.msra.mxu0 0.0
    %1715 = vmatprep.subr.mxu0 0.0
    %1716 = vmatpush1.msra.mxu0 0.0
    %1717 = vmatprep.subr.mxu0 0.0
    %1718 = vmatpush1.msra.mxu0 0.0
    %1719 = vmatprep.subr.mxu0 0.0
    %1720 = vmatpush1.msra.mxu0 0.0
    %1721 = vmatprep.subr.mxu0 0.0
    %1722 = vmatpush1.msra.mxu0 0.0
    %1723 = vmatprep.subr.mxu0 0.0
    %1724 = vmatpush1.msra.mxu0 0.0
    %1725 = vmatprep.subr.mxu0 0.0
    %1726 = vmatpush1.msra.mxu0 0.0
    %1727 = vmatprep.subr.mxu0 0.0
    %1728 = vmatpush1.msra.mxu0 0.0
    %1729 = vmatprep.subr.mxu0 0.0
    %1730 = vmatpush1.msra.mxu0 0.0
    %1731 = vmatprep.subr.mxu0 0.0
    %1732 = vmatpush1.msra.mxu0 0.0
    %1733 = vmatprep.subr.mxu0 0.0
    %1734 = vmatpush1.msra.mxu0 0.0
    %1735 = vmatprep.subr.mxu0 0.0
    %1736 = vmatpush1.msra.mxu0 0.0
    %1737 = vmatprep.subr.mxu0 0.0
    %1738 = vmatpush1.msra.mxu0 0.0
    %1739 = vmatprep.subr.mxu0 0.0
    %1740 = vmatpush1.msra.mxu0 0.0
    %1741 = vmatprep.subr.mxu0 0.0
    %1742 = vmatpush1.msra.mxu0 0.0
    %1743 = vmatprep.subr.mxu0 0.0
    %1744 = vmatpush1.msra.mxu0 0.0
    %1745 = vmatprep.subr.mxu0 0.0
    %1746 = vmatpush1.msra.mxu0 0.0
    %1747 = vmatprep.subr.mxu0 0.0
    %1748 = vmatpush1.msra.mxu0 0.0
    %1749 = vmatprep.subr.mxu0 0.0
    %1750 = vmatpush1.msra.mxu0 0.0
    %1751 = vmatprep.mubr.f32.mxu0 0.0
    %1752 = vmatmul.mubr.f32.gmra.mrb[0].mxu0 %v1685
    %v1753 = vpop.f32.mrb[0].mxu0
    %v1754 = vadd.f32 %v1682, %v1753
    %v1755 = vpop.f32.mrb[0].mxu0
    %1756 = vdwg.mxu0
    %v1757 = vand.u32 2147483647, %v1754
    %v1758 = vsub.f32 0.0, %v1757
    %v1759 = vmul.f32 %v1758, 1.442695
    %v1760 = vpow.pop %v1759
    %v1761 = vadd.f32 %v1760, 1.0
    %v1762 = vrcp.pop %v1761
    %v1763 = vmul.f32 1.0, %v1762
    %vm1764 = vcmp.ge.f32.partialorder %v1754, 0.0
    %v1765 = vmul.f32 %v1760, %v1763
    %v1766 = vsel %vm1764, %v1763, %v1765
    %vm1767 = vcmask 99328
    %1768 = vst.msk [vmem:[#allocation5] sm:$0x3] %vm1767, %v1766
    // Predicated region
    $region82: #{tpu_custom_call.1} parent=1 // pred_check
      _
    $region83: #{tpu_custom_call.1} parent=1 // pred_check_branch
      %1770 = sbr.rel (0) target = $region85
    $region84: #{tpu_custom_call.1} parent=1 // pred_region
      %s1772 = ssub.s32 32, 32
      %1773 = vsyncadd [#allocation4], %s1772
      %s1775 = sshll.u32 [#allocation5], 4
      %s1776 = int_to_ptr.vmem [resolvable:$true] %s1775
      %1778 = dma.vmem_to_hbm [thread:$0]  %s1776, 32, %s19, [#allocation4]
    $region85: #{tpu_custom_call.1} parent=1 // pred_fallthru
      _
    // Predicated region
    $region86: #{tpu_custom_call.1} parent=1 // pred_check
      _
    $region87: #{tpu_custom_call.1} parent=1 // pred_check_branch
      %1780 = sbr.rel (0) target = $region89
    $region88: #{tpu_custom_call.1} parent=1 // pred_region
      %1781 = dma.done [#allocation4], 32
    $region89: #{tpu_custom_call.1} parent=1 // pred_fallthru
      _
    %1782 = vsyncpa [#allocation3], 1
    %1783 = vsyncpa [#allocation4], 1

</llo_original>
